<compile_context>
chip_gen: v7x
topology: tpu7x:2x2x1
jax: 0.10.0
libtpu: 0.0.40
codegen_flags: <defaults>
</compile_context>

<pallas_src>
import jax
import jax.numpy as jnp
from jax import lax
from jax.experimental import pallas as pl
from jax.experimental.pallas import tpu as pltpu


def num_channels_to_num_groups(num_channels):
    if num_channels < 8:
        return 1
    if num_channels < 32:
        return 2
    if num_channels < 64:
        return 4
    if num_channels < 128:
        return 8
    if num_channels < 256:
        return 16
    return 32


# --------------------------------- kernel ------------------------------------
def _make_kernel(nb, H, W, C, f0, f1):
    HW = H * W
    L = nb * HW

    def gn_lrelu(h, avg, gamma, beta):
        # h: (ch, L) f32.  GroupNorm(eps=1e-5) + LeakyReLU(0.2) with per-image
        # statistics (aligned HW-wide lane segments).  Two-pass variance.
        # TODO(synk): for large channel counts, replace the (ch,ch) group-average
        # matvec with a segment-sum over the C/G channels of each group.
        ch = h.shape[0]
        pieces = []
        for b in range(nb):                       # nb is capped small (<= 8)
            hb = h[:, b * HW:(b + 1) * HW]        # lane-aligned static slice
            s = jnp.sum(hb, axis=1, keepdims=True)                    # (ch, 1)
            mean = jnp.sum(avg * s.reshape(1, ch), axis=1, keepdims=True)
            d = hb - mean
            ss = jnp.sum(d * d, axis=1, keepdims=True)                # (ch, 1)
            var = jnp.sum(avg * ss.reshape(1, ch), axis=1, keepdims=True)
            y = d * (lax.rsqrt(var + 1e-5) * gamma) + beta
            pieces.append(jnp.maximum(y, 0.2 * y))                    # LeakyReLU
        return pieces[0] if nb == 1 else jnp.concatenate(pieces, axis=1)

    def kernel(x_ref, mask_ref,
               g1_ref, b1_ref, a1_ref, w1_ref,
               g2_ref, b2_ref, a2_ref, w2_ref,
               g3_ref, b3_ref, a3_ref, w3_ref,
               o_ref):
        x = x_ref[...]                                    # (C, L) f32
        g1, b1, a1 = g1_ref[...], b1_ref[...], a1_ref[...]
        g2, b2, a2 = g2_ref[...], b2_ref[...], a2_ref[...]
        g3, b3, a3 = g3_ref[...], b3_ref[...], a3_ref[...]
        w1, w2, w3 = w1_ref[...], w2_ref[...], w3_ref[...]

        # --- GN + LReLU + 1x1 conv (C -> f0): one matmul for all nb images ---
        h = gn_lrelu(x, a1, g1, b1)
        h = jnp.dot(w1, h.astype(jnp.bfloat16),
                    preferred_element_type=jnp.float32)               # (f0, L)

        # --- GN + LReLU + 3x3 conv pad=1 (f0 -> f1): roll taps + f32 masks ---
        # TODO(synk): for very large H*W*f0 (v7x 64 MiB VMEM), row-tile with a
        # 1-row halo and split the im2col dot into 3 accumulated K=3*f0 dots.
        h = gn_lrelu(h, a2, g2, b2)                                   # (f0, L) f32
        taps = []
        k = 0
        for dy in (-1, 0, 1):
            for dx in (-1, 0, 1):
                s = dy * W + dx
                t = h if s == 0 else pltpu.roll(h, shift=(-s) % L, axis=1)
                if not (dy == 0 and dx == 0):
                    t = t * mask_ref[k:k + 1, :]   # zero padding / wrap (f32)
                taps.append(t)
                k += 1
        im2col = jnp.concatenate(taps, axis=0).astype(jnp.bfloat16)   # (9*f0, L)
        h = jnp.dot(w2, im2col, preferred_element_type=jnp.float32)   # (f1, L)

        # --- GN + LReLU + 1x1 conv (f1 -> C) ----------------------------------
        h = gn_lrelu(h, a3, g3, b3)
        h = jnp.dot(w3, h.astype(jnp.bfloat16),
                    preferred_element_type=jnp.float32)               # (C, L)

        # --- residual add (f32) -----------------------------------------------
        o_ref[...] = x + h

    return kernel


# -------------------------------- wrapper -------------------------------------
def _group_avg_matrix(ch, hw):
    groups = num_channels_to_num_groups(ch)
    cg = ch // groups
    gid = jnp.arange(ch, dtype=jnp.int32) // cg
    same = (gid[:, None] == gid[None, :]).astype(jnp.float32)
    return same / float(cg * hw)                                      # (ch, ch)


def _tap_masks(H, W, nb):
    # mask[k, p] = 1 iff tap k = (dy,dx) reads an in-bounds pixel at position p.
    hw = H * W
    yy = jnp.arange(hw, dtype=jnp.int32) // W
    xx = jnp.arange(hw, dtype=jnp.int32) % W
    rows = []
    for dy in (-1, 0, 1):
        for dx in (-1, 0, 1):
            valid = ((yy + dy >= 0) & (yy + dy < H) &
                     (xx + dx >= 0) & (xx + dx < W))
            rows.append(valid)
    m = jnp.stack(rows).astype(jnp.float32)                           # (9, HW)
    return jnp.tile(m, (1, nb))                                       # (9, nb*HW)


def _vmem_capacity_bytes():
    try:
        return int(pltpu.get_tpu_info().vmem_capacity_bytes)
    except Exception:
        return 64 * 2 ** 20          # conservative (v7x per-TensorCore)


def _num_tensorcores():
    try:
        kind = jax.devices()[0].device_kind.lower()
    except Exception:
        return 1
    # Single-TensorCore chips (lite parts: v5e / v6e); megacore parts have 2.
    if "lite" in kind or "v5e" in kind or "v6e" in kind:
        return 1
    return 2


def _pick_images_per_block(n, hw, per_image_bytes, budget, num_cores, max_nb=8):
    if hw % 128 != 0:
        # Block must span the full lane axis if HW is not lane-aligned.
        # TODO(synk): large non-aligned H*W should use row tiling with a halo.
        return n
    candidates = []
    for nb in range(1, min(n, max_nb) + 1):
        if n % nb:
            continue
        if nb > 1 and nb * per_image_bytes > budget:
            continue
        steps = n // nb
        candidates.append((steps % num_cores == 0, nb))
    if not candidates:
        return 1
    candidates.sort()
    # Largest block among splits that keep every TensorCore busy, if any exist.
    return candidates[-1][1]


def res_block_2d(x_nchw, torch_params):
    """Pallas ResBlock2d forward. x_nchw: (N, C, H, W) float32, NCHW in/out."""
    g1, b1, w1, g2, b2, w2, g3, b3, w3 = torch_params
    N, C, H, W = x_nchw.shape
    f0, f1 = w1.shape[0], w2.shape[0]
    HW = H * W

    # Kernel layout: batch folded into the lane axis -> (C, N*H*W).
    x2 = jnp.transpose(x_nchw.astype(jnp.float32), (1, 0, 2, 3)).reshape(C, N * HW)

    f32 = jnp.float32
    k_g1, k_b1 = g1.reshape(C, 1).astype(f32), b1.reshape(C, 1).astype(f32)
    k_g2, k_b2 = g2.reshape(f0, 1).astype(f32), b2.reshape(f0, 1).astype(f32)
    k_g3, k_b3 = g3.reshape(f1, 1).astype(f32), b3.reshape(f1, 1).astype(f32)
    k_w1 = w1[:, :, 0, 0].astype(jnp.bfloat16)                        # (f0, C)
    k_w2 = jnp.transpose(w2, (0, 2, 3, 1)).reshape(f1, 9 * f0).astype(jnp.bfloat16)
    k_w3 = w3[:, :, 0, 0].astype(jnp.bfloat16)                        # (C, f1)
    a1 = _group_avg_matrix(C, HW)
    a2 = _group_avg_matrix(f0, HW)
    a3 = _group_avg_matrix(f1, HW)

    # Rough per-image VMEM working set (f32 activations + f32 taps + bf16 copies
    # + tap masks).  Used only to pick images-per-block and the vmem limit.
    per_image = HW * (4 * (3 * C + 12 * f0 + 2 * f1 + 9)
                      + 2 * (C + 10 * f0 + 2 * f1))
    vmem_cap = _vmem_capacity_bytes()
    vmem_cap_limit = max(vmem_cap - 16 * 2 ** 20, vmem_cap // 2)  # compiler headroom
    num_cores = _num_tensorcores()
    nb = _pick_images_per_block(N, HW, per_image, vmem_cap_limit // 3, num_cores)
    L = nb * HW

    weight_bytes = (2 * (f0 * C + f1 * 9 * f0 + C * f1)
                    + 4 * (C * C + f0 * f0 + f1 * f1 + 2 * (C + f0 + f1)))
    est_vmem = 3 * nb * per_image + 2 * weight_bytes
    vmem_limit = None
    if est_vmem > 12 * 2 ** 20:        # above v5e's 16 MiB scoped default soon
        vmem_limit = int(min(max(est_vmem, 32 * 2 ** 20), vmem_cap_limit))

    tap_mask = _tap_masks(H, W, nb)                                   # (9, L) f32
    kernel = _make_kernel(nb, H, W, C, f0, f1)

    def const(shape):
        nd = len(shape)
        return pl.BlockSpec(shape, lambda n, _nd=nd: (0,) * _nd)

    in_specs = [
        pl.BlockSpec((C, L), lambda n: (0, n)),                        # x slab
        const((9, L)),                                                 # tap masks
        const((C, 1)), const((C, 1)), const((C, C)), const((f0, C)),   # GN1 + w1
        const((f0, 1)), const((f0, 1)), const((f0, f0)), const((f1, 9 * f0)),
        const((f1, 1)), const((f1, 1)), const((f1, f1)), const((C, f1)),
    ]
    out_specs = pl.BlockSpec((C, L), lambda n: (0, n))

    pallas_fn = pl.pallas_call(
        kernel,
        out_shape=jax.ShapeDtypeStruct((C, N * HW), jnp.float32),
        grid=(N // nb,),
        in_specs=in_specs,
        out_specs=out_specs,
        input_output_aliases={0: 0},       # residual output reuses the x buffer
        compiler_params=pltpu.CompilerParams(
            dimension_semantics=("parallel",),
            vmem_limit_bytes=vmem_limit),
    )
    # jit + donation so the input/output aliasing is honored without copies.
    out = jax.jit(pallas_fn, donate_argnums=(0,))(
        x2, tap_mask, k_g1, k_b1, a1, k_w1, k_g2, k_b2, a2, k_w2,
        k_g3, k_b3, a3, k_w3)
    return jnp.transpose(out.reshape(C, N, H, W), (1, 0, 2, 3))


# ---------------- deterministic parameter init (synthetic, no checkpoint) ------
def init_params(key, C, f0, f1):
    ks = jax.random.split(key, 9)
    scale = lambda fan_in: 1.0 / float(fan_in) ** 0.5
    g1 = 1.0 + 0.1 * jax.random.normal(ks[0], (C,), jnp.float32)
    b1 = 0.1 * jax.random.normal(ks[1], (C,), jnp.float32)
    w1 = jax.random.normal(ks[2], (f0, C, 1, 1), jnp.float32) * scale(C)
    g2 = 1.0 + 0.1 * jax.random.normal(ks[3], (f0,), jnp.float32)
    b2 = 0.1 * jax.random.normal(ks[4], (f0,), jnp.float32)
    w2 = jax.random.normal(ks[5], (f1, f0, 3, 3), jnp.float32) * scale(9 * f0)
    g3 = 1.0 + 0.1 * jax.random.normal(ks[6], (f1,), jnp.float32)
    b3 = 0.1 * jax.random.normal(ks[7], (f1,), jnp.float32)
    w3 = jax.random.normal(ks[8], (C, f1, 1, 1), jnp.float32) * scale(f1)
    return (g1, b1, w1, g2, b2, w2, g3, b3, w3)


# ---------------- pure-JAX reference (mirrors the PyTorch module) --------------
def _groupnorm_ref(x, gamma, beta, G, eps=1e-5):
    N, C, H, W = x.shape
    xg = x.reshape(N, G, C // G, H, W)
    mean = jnp.mean(xg, axis=(2, 3, 4), keepdims=True)
    var = jnp.mean((xg - mean) ** 2, axis=(2, 3, 4), keepdims=True)
    xn = ((xg - mean) / jnp.sqrt(var + eps)).reshape(N, C, H, W)
    return xn * gamma.reshape(1, C, 1, 1) + beta.reshape(1, C, 1, 1)


def _leaky_ref(x):
    return jnp.where(x > 0, x, 0.2 * x)


def _conv_ref(x, w, pad, dt):
    return lax.conv_general_dilated(
        x.astype(dt), w.astype(dt), (1, 1), [(pad, pad), (pad, pad)],
        dimension_numbers=("NCHW", "OIHW", "NCHW"),
        preferred_element_type=jnp.float32)


def res_block_ref(x, params, matmul_dtype=jnp.float32):
    g1, b1, w1, g2, b2, w2, g3, b3, w3 = params
    C, f0, f1 = x.shape[1], w1.shape[0], w2.shape[0]
    h = _groupnorm_ref(x, g1, b1, num_channels_to_num_groups(C))
    h = _leaky_ref(h)
    h = _conv_ref(h, w1, 0, matmul_dtype)
    h = _groupnorm_ref(h, g2, b2, num_channels_to_num_groups(f0))
    h = _leaky_ref(h)
    h = _conv_ref(h, w2, 1, matmul_dtype)
    h = _groupnorm_ref(h, g3, b3, num_channels_to_num_groups(f1))
    h = _leaky_ref(h)
    h = _conv_ref(h, w3, 0, matmul_dtype)
    return x + h


if __name__ == "__main__":
    key = jax.random.PRNGKey(0)
    N, C, H, W = 2, 4, 16, 16
    num_filters = [8, 8]

    kx, kp = jax.random.split(key)
    x = jax.random.normal(kx, (N, C, H, W), jnp.float32)
    params = init_params(kp, C, num_filters[0], num_filters[1])

    out = jax.block_until_ready(res_block_2d(x, params))
    assert out.shape == x.shape

    # Tight check vs a reference that also feeds the convs bf16 operands
    # (matches the kernel's MXU dtype); loose sanity check vs the pure-f32 module.
    ref_bf16 = res_block_ref(x, params, jnp.bfloat16)
    ref_f32 = res_block_ref(x, params, jnp.float32)
    err = float(jnp.max(jnp.abs(out - ref_bf16)))
    assert err < 1e-2, f"max abs err vs bf16-matmul reference: {err}"
    err_f32 = float(jnp.max(jnp.abs(out - ref_f32)))
    assert err_f32 < 0.35, f"max abs err vs f32 reference: {err_f32}"
    print("KERNEL_OK")
</pallas_src>

<mosaic_0001>
module attributes {stable_mosaic.version = 11 : i64} {
  func.func @kernel(%arg0: i32, %arg1: memref<4x256xf32, #tpu.memory_space<vmem>>, %arg2: memref<9x256xf32, #tpu.memory_space<vmem>>, %arg3: memref<4x1xf32, #tpu.memory_space<vmem>>, %arg4: memref<4x1xf32, #tpu.memory_space<vmem>>, %arg5: memref<4x4xf32, #tpu.memory_space<vmem>>, %arg6: memref<8x4xbf16, #tpu.memory_space<vmem>>, %arg7: memref<8x1xf32, #tpu.memory_space<vmem>>, %arg8: memref<8x1xf32, #tpu.memory_space<vmem>>, %arg9: memref<8x8xf32, #tpu.memory_space<vmem>>, %arg10: memref<8x72xbf16, #tpu.memory_space<vmem>>, %arg11: memref<8x1xf32, #tpu.memory_space<vmem>>, %arg12: memref<8x1xf32, #tpu.memory_space<vmem>>, %arg13: memref<8x8xf32, #tpu.memory_space<vmem>>, %arg14: memref<4x8xbf16, #tpu.memory_space<vmem>>, %arg15: memref<4x256xf32, #tpu.memory_space<vmem>>) attributes {dimension_semantics = [#tpu.dimension_semantics<parallel>], iteration_bounds = array<i64: 2>, scalar_prefetch = 0 : i64, scratch_operands = 0 : i64, tpu.core_type = #tpu.core_type<tc>, window_params = [{transform_indices = @transform_0, window_bounds = array<i64: 4, 256>}, {pipeline_mode = #tpu.pipeline_mode<synchronous>, transform_indices = @transform_1, window_bounds = array<i64: 9, 256>}, {pipeline_mode = #tpu.pipeline_mode<synchronous>, transform_indices = @transform_2, window_bounds = array<i64: 4, 1>}, {pipeline_mode = #tpu.pipeline_mode<synchronous>, transform_indices = @transform_3, window_bounds = array<i64: 4, 1>}, {pipeline_mode = #tpu.pipeline_mode<synchronous>, transform_indices = @transform_4, window_bounds = array<i64: 4, 4>}, {pipeline_mode = #tpu.pipeline_mode<synchronous>, transform_indices = @transform_5, window_bounds = array<i64: 8, 4>}, {pipeline_mode = #tpu.pipeline_mode<synchronous>, transform_indices = @transform_6, window_bounds = array<i64: 8, 1>}, {pipeline_mode = #tpu.pipeline_mode<synchronous>, transform_indices = @transform_7, window_bounds = array<i64: 8, 1>}, {pipeline_mode = #tpu.pipeline_mode<synchronous>, transform_indices = @transform_8, window_bounds = array<i64: 8, 8>}, {pipeline_mode = #tpu.pipeline_mode<synchronous>, transform_indices = @transform_9, window_bounds = array<i64: 8, 72>}, {pipeline_mode = #tpu.pipeline_mode<synchronous>, transform_indices = @transform_10, window_bounds = array<i64: 8, 1>}, {pipeline_mode = #tpu.pipeline_mode<synchronous>, transform_indices = @transform_11, window_bounds = array<i64: 8, 1>}, {pipeline_mode = #tpu.pipeline_mode<synchronous>, transform_indices = @transform_12, window_bounds = array<i64: 8, 8>}, {pipeline_mode = #tpu.pipeline_mode<synchronous>, transform_indices = @transform_13, window_bounds = array<i64: 4, 8>}, {transform_indices = @transform_14, window_bounds = array<i64: 4, 256>}]} {
    %c0 = arith.constant 0 : index
    %c0_0 = arith.constant 0 : index
    %0 = vector.load %arg1[%c0, %c0_0] : memref<4x256xf32, #tpu.memory_space<vmem>>, vector<4x256xf32>
    %c0_1 = arith.constant 0 : index
    %c0_2 = arith.constant 0 : index
    %1 = vector.load %arg3[%c0_1, %c0_2] : memref<4x1xf32, #tpu.memory_space<vmem>>, vector<4x1xf32>
    %c0_3 = arith.constant 0 : index
    %c0_4 = arith.constant 0 : index
    %2 = vector.load %arg4[%c0_3, %c0_4] : memref<4x1xf32, #tpu.memory_space<vmem>>, vector<4x1xf32>
    %c0_5 = arith.constant 0 : index
    %c0_6 = arith.constant 0 : index
    %3 = vector.load %arg5[%c0_5, %c0_6] : memref<4x4xf32, #tpu.memory_space<vmem>>, vector<4x4xf32>
    %c0_7 = arith.constant 0 : index
    %c0_8 = arith.constant 0 : index
    %4 = vector.load %arg7[%c0_7, %c0_8] : memref<8x1xf32, #tpu.memory_space<vmem>>, vector<8x1xf32>
    %c0_9 = arith.constant 0 : index
    %c0_10 = arith.constant 0 : index
    %5 = vector.load %arg8[%c0_9, %c0_10] : memref<8x1xf32, #tpu.memory_space<vmem>>, vector<8x1xf32>
    %c0_11 = arith.constant 0 : index
    %c0_12 = arith.constant 0 : index
    %6 = vector.load %arg9[%c0_11, %c0_12] : memref<8x8xf32, #tpu.memory_space<vmem>>, vector<8x8xf32>
    %c0_13 = arith.constant 0 : index
    %c0_14 = arith.constant 0 : index
    %7 = vector.load %arg11[%c0_13, %c0_14] : memref<8x1xf32, #tpu.memory_space<vmem>>, vector<8x1xf32>
    %c0_15 = arith.constant 0 : index
    %c0_16 = arith.constant 0 : index
    %8 = vector.load %arg12[%c0_15, %c0_16] : memref<8x1xf32, #tpu.memory_space<vmem>>, vector<8x1xf32>
    %c0_17 = arith.constant 0 : index
    %c0_18 = arith.constant 0 : index
    %9 = vector.load %arg13[%c0_17, %c0_18] : memref<8x8xf32, #tpu.memory_space<vmem>>, vector<8x8xf32>
    %c0_19 = arith.constant 0 : index
    %c0_20 = arith.constant 0 : index
    %10 = vector.load %arg6[%c0_19, %c0_20] : memref<8x4xbf16, #tpu.memory_space<vmem>>, vector<8x4xbf16>
    %c0_21 = arith.constant 0 : index
    %c0_22 = arith.constant 0 : index
    %11 = vector.load %arg10[%c0_21, %c0_22] : memref<8x72xbf16, #tpu.memory_space<vmem>>, vector<8x72xbf16>
    %c0_23 = arith.constant 0 : index
    %c0_24 = arith.constant 0 : index
    %12 = vector.load %arg14[%c0_23, %c0_24] : memref<4x8xbf16, #tpu.memory_space<vmem>>, vector<4x8xbf16>
    %cst = arith.constant dense<0.000000e+00> : vector<4xf32>
    %13 = vector.multi_reduction <add>, %0, %cst [1] : vector<4x256xf32> to vector<4xf32>
    %14 = vector.shape_cast %13 : vector<4xf32> to vector<4x1xf32>
    %15 = vector.shape_cast %14 : vector<4x1xf32> to vector<1x4xf32>
    %16 = vector.broadcast %15 : vector<1x4xf32> to vector<4x4xf32>
    %17 = arith.mulf %3, %16 : vector<4x4xf32>
    %cst_25 = arith.constant dense<0.000000e+00> : vector<4xf32>
    %18 = vector.multi_reduction <add>, %17, %cst_25 [1] : vector<4x4xf32> to vector<4xf32>
    %19 = vector.shape_cast %18 : vector<4xf32> to vector<4x1xf32>
    %20 = vector.broadcast %19 : vector<4x1xf32> to vector<4x256xf32>
    %21 = arith.subf %0, %20 : vector<4x256xf32>
    %22 = arith.mulf %21, %21 : vector<4x256xf32>
    %cst_26 = arith.constant dense<0.000000e+00> : vector<4xf32>
    %23 = vector.multi_reduction <add>, %22, %cst_26 [1] : vector<4x256xf32> to vector<4xf32>
    %24 = vector.shape_cast %23 : vector<4xf32> to vector<4x1xf32>
    %25 = vector.shape_cast %24 : vector<4x1xf32> to vector<1x4xf32>
    %26 = vector.broadcast %25 : vector<1x4xf32> to vector<4x4xf32>
    %27 = arith.mulf %3, %26 : vector<4x4xf32>
    %cst_27 = arith.constant dense<0.000000e+00> : vector<4xf32>
    %28 = vector.multi_reduction <add>, %27, %cst_27 [1] : vector<4x4xf32> to vector<4xf32>
    %29 = vector.shape_cast %28 : vector<4xf32> to vector<4x1xf32>
    %cst_28 = arith.constant 9.99999974E-6 : f32
    %30 = vector.broadcast %cst_28 : f32 to vector<4x1xf32>
    %31 = arith.addf %29, %30 : vector<4x1xf32>
    %32 = math.rsqrt %31 : vector<4x1xf32>
    %33 = arith.mulf %32, %1 : vector<4x1xf32>
    %34 = vector.broadcast %33 : vector<4x1xf32> to vector<4x256xf32>
    %35 = arith.mulf %21, %34 : vector<4x256xf32>
    %36 = vector.broadcast %2 : vector<4x1xf32> to vector<4x256xf32>
    %37 = arith.addf %35, %36 : vector<4x256xf32>
    %cst_29 = arith.constant 2.000000e-01 : f32
    %38 = vector.broadcast %cst_29 : f32 to vector<4x256xf32>
    %39 = arith.mulf %38, %37 : vector<4x256xf32>
    %40 = arith.maximumf %37, %39 : vector<4x256xf32>
    %41 = arith.truncf %40 : vector<4x256xf32> to vector<4x256xbf16>
    %cst_30 = arith.constant dense<0.000000e+00> : vector<8x256xf32>
    %42 = tpu.matmul %10, %41, %cst_30 {dimension_numbers = #tpu.dot_dimension_numbers<[1], [0], [0], [1], [0, 0, 1, 1], [], []>} : vector<8x4xbf16>, vector<4x256xbf16>, vector<8x256xf32> -> vector<8x256xf32>
    %cst_31 = arith.constant dense<0.000000e+00> : vector<8xf32>
    %43 = vector.multi_reduction <add>, %42, %cst_31 [1] : vector<8x256xf32> to vector<8xf32>
    %44 = vector.shape_cast %43 : vector<8xf32> to vector<8x1xf32>
    %45 = vector.shape_cast %44 : vector<8x1xf32> to vector<1x8xf32>
    %46 = vector.broadcast %45 : vector<1x8xf32> to vector<8x8xf32>
    %47 = arith.mulf %6, %46 : vector<8x8xf32>
    %cst_32 = arith.constant dense<0.000000e+00> : vector<8xf32>
    %48 = vector.multi_reduction <add>, %47, %cst_32 [1] : vector<8x8xf32> to vector<8xf32>
    %49 = vector.shape_cast %48 : vector<8xf32> to vector<8x1xf32>
    %50 = vector.broadcast %49 : vector<8x1xf32> to vector<8x256xf32>
    %51 = arith.subf %42, %50 : vector<8x256xf32>
    %52 = arith.mulf %51, %51 : vector<8x256xf32>
    %cst_33 = arith.constant dense<0.000000e+00> : vector<8xf32>
    %53 = vector.multi_reduction <add>, %52, %cst_33 [1] : vector<8x256xf32> to vector<8xf32>
    %54 = vector.shape_cast %53 : vector<8xf32> to vector<8x1xf32>
    %55 = vector.shape_cast %54 : vector<8x1xf32> to vector<1x8xf32>
    %56 = vector.broadcast %55 : vector<1x8xf32> to vector<8x8xf32>
    %57 = arith.mulf %6, %56 : vector<8x8xf32>
    %cst_34 = arith.constant dense<0.000000e+00> : vector<8xf32>
    %58 = vector.multi_reduction <add>, %57, %cst_34 [1] : vector<8x8xf32> to vector<8xf32>
    %59 = vector.shape_cast %58 : vector<8xf32> to vector<8x1xf32>
    %cst_35 = arith.constant 9.99999974E-6 : f32
    %60 = vector.broadcast %cst_35 : f32 to vector<8x1xf32>
    %61 = arith.addf %59, %60 : vector<8x1xf32>
    %62 = math.rsqrt %61 : vector<8x1xf32>
    %63 = arith.mulf %62, %4 : vector<8x1xf32>
    %64 = vector.broadcast %63 : vector<8x1xf32> to vector<8x256xf32>
    %65 = arith.mulf %51, %64 : vector<8x256xf32>
    %66 = vector.broadcast %5 : vector<8x1xf32> to vector<8x256xf32>
    %67 = arith.addf %65, %66 : vector<8x256xf32>
    %cst_36 = arith.constant 2.000000e-01 : f32
    %68 = vector.broadcast %cst_36 : f32 to vector<8x256xf32>
    %69 = arith.mulf %68, %67 : vector<8x256xf32>
    %70 = arith.maximumf %67, %69 : vector<8x256xf32>
    %c17_i32 = arith.constant 17 : i32
    %71 = tpu.dynamic_rotate %70 by %c17_i32 dim 1 : vector<8x256xf32>, i32 -> vector<8x256xf32>
    %c0_37 = arith.constant 0 : index
    %c0_38 = arith.constant 0 : index
    %72 = vector.load %arg2[%c0_37, %c0_38] : memref<9x256xf32, #tpu.memory_space<vmem>>, vector<1x256xf32>
    %73 = vector.broadcast %72 : vector<1x256xf32> to vector<8x256xf32>
    %74 = arith.mulf %71, %73 : vector<8x256xf32>
    %c16_i32 = arith.constant 16 : i32
    %75 = tpu.dynamic_rotate %70 by %c16_i32 dim 1 : vector<8x256xf32>, i32 -> vector<8x256xf32>
    %c1 = arith.constant 1 : index
    %c0_39 = arith.constant 0 : index
    %76 = vector.load %arg2[%c1, %c0_39] : memref<9x256xf32, #tpu.memory_space<vmem>>, vector<1x256xf32>
    %77 = vector.broadcast %76 : vector<1x256xf32> to vector<8x256xf32>
    %78 = arith.mulf %75, %77 : vector<8x256xf32>
    %c15_i32 = arith.constant 15 : i32
    %79 = tpu.dynamic_rotate %70 by %c15_i32 dim 1 : vector<8x256xf32>, i32 -> vector<8x256xf32>
    %c2 = arith.constant 2 : index
    %c0_40 = arith.constant 0 : index
    %80 = vector.load %arg2[%c2, %c0_40] : memref<9x256xf32, #tpu.memory_space<vmem>>, vector<1x256xf32>
    %81 = vector.broadcast %80 : vector<1x256xf32> to vector<8x256xf32>
    %82 = arith.mulf %79, %81 : vector<8x256xf32>
    %c1_i32 = arith.constant 1 : i32
    %83 = tpu.dynamic_rotate %70 by %c1_i32 dim 1 : vector<8x256xf32>, i32 -> vector<8x256xf32>
    %c3 = arith.constant 3 : index
    %c0_41 = arith.constant 0 : index
    %84 = vector.load %arg2[%c3, %c0_41] : memref<9x256xf32, #tpu.memory_space<vmem>>, vector<1x256xf32>
    %85 = vector.broadcast %84 : vector<1x256xf32> to vector<8x256xf32>
    %86 = arith.mulf %83, %85 : vector<8x256xf32>
    %c255_i32 = arith.constant 255 : i32
    %87 = tpu.dynamic_rotate %70 by %c255_i32 dim 1 : vector<8x256xf32>, i32 -> vector<8x256xf32>
    %c5 = arith.constant 5 : index
    %c0_42 = arith.constant 0 : index
    %88 = vector.load %arg2[%c5, %c0_42] : memref<9x256xf32, #tpu.memory_space<vmem>>, vector<1x256xf32>
    %89 = vector.broadcast %88 : vector<1x256xf32> to vector<8x256xf32>
    %90 = arith.mulf %87, %89 : vector<8x256xf32>
    %c241_i32 = arith.constant 241 : i32
    %91 = tpu.dynamic_rotate %70 by %c241_i32 dim 1 : vector<8x256xf32>, i32 -> vector<8x256xf32>
    %c6 = arith.constant 6 : index
    %c0_43 = arith.constant 0 : index
    %92 = vector.load %arg2[%c6, %c0_43] : memref<9x256xf32, #tpu.memory_space<vmem>>, vector<1x256xf32>
    %93 = vector.broadcast %92 : vector<1x256xf32> to vector<8x256xf32>
    %94 = arith.mulf %91, %93 : vector<8x256xf32>
    %c240_i32 = arith.constant 240 : i32
    %95 = tpu.dynamic_rotate %70 by %c240_i32 dim 1 : vector<8x256xf32>, i32 -> vector<8x256xf32>
    %c7 = arith.constant 7 : index
    %c0_44 = arith.constant 0 : index
    %96 = vector.load %arg2[%c7, %c0_44] : memref<9x256xf32, #tpu.memory_space<vmem>>, vector<1x256xf32>
    %97 = vector.broadcast %96 : vector<1x256xf32> to vector<8x256xf32>
    %98 = arith.mulf %95, %97 : vector<8x256xf32>
    %c239_i32 = arith.constant 239 : i32
    %99 = tpu.dynamic_rotate %70 by %c239_i32 dim 1 : vector<8x256xf32>, i32 -> vector<8x256xf32>
    %c8 = arith.constant 8 : index
    %c0_45 = arith.constant 0 : index
    %100 = vector.load %arg2[%c8, %c0_45] : memref<9x256xf32, #tpu.memory_space<vmem>>, vector<1x256xf32>
    %101 = vector.broadcast %100 : vector<1x256xf32> to vector<8x256xf32>
    %102 = arith.mulf %99, %101 : vector<8x256xf32>
    %103 = tpu.concatenate %74, %78, %82, %86, %70, %90, %94, %98, %102 in 0 : vector<8x256xf32>, vector<8x256xf32>, vector<8x256xf32>, vector<8x256xf32>, vector<8x256xf32>, vector<8x256xf32>, vector<8x256xf32>, vector<8x256xf32>, vector<8x256xf32> -> vector<72x256xf32>
    %104 = arith.truncf %103 : vector<72x256xf32> to vector<72x256xbf16>
    %cst_46 = arith.constant dense<0.000000e+00> : vector<8x256xf32>
    %105 = tpu.matmul %11, %104, %cst_46 {dimension_numbers = #tpu.dot_dimension_numbers<[1], [0], [0], [1], [0, 0, 1, 1], [], []>} : vector<8x72xbf16>, vector<72x256xbf16>, vector<8x256xf32> -> vector<8x256xf32>
    %cst_47 = arith.constant dense<0.000000e+00> : vector<8xf32>
    %106 = vector.multi_reduction <add>, %105, %cst_47 [1] : vector<8x256xf32> to vector<8xf32>
    %107 = vector.shape_cast %106 : vector<8xf32> to vector<8x1xf32>
    %108 = vector.shape_cast %107 : vector<8x1xf32> to vector<1x8xf32>
    %109 = vector.broadcast %108 : vector<1x8xf32> to vector<8x8xf32>
    %110 = arith.mulf %9, %109 : vector<8x8xf32>
    %cst_48 = arith.constant dense<0.000000e+00> : vector<8xf32>
    %111 = vector.multi_reduction <add>, %110, %cst_48 [1] : vector<8x8xf32> to vector<8xf32>
    %112 = vector.shape_cast %111 : vector<8xf32> to vector<8x1xf32>
    %113 = vector.broadcast %112 : vector<8x1xf32> to vector<8x256xf32>
    %114 = arith.subf %105, %113 : vector<8x256xf32>
    %115 = arith.mulf %114, %114 : vector<8x256xf32>
    %cst_49 = arith.constant dense<0.000000e+00> : vector<8xf32>
    %116 = vector.multi_reduction <add>, %115, %cst_49 [1] : vector<8x256xf32> to vector<8xf32>
    %117 = vector.shape_cast %116 : vector<8xf32> to vector<8x1xf32>
    %118 = vector.shape_cast %117 : vector<8x1xf32> to vector<1x8xf32>
    %119 = vector.broadcast %118 : vector<1x8xf32> to vector<8x8xf32>
    %120 = arith.mulf %9, %119 : vector<8x8xf32>
    %cst_50 = arith.constant dense<0.000000e+00> : vector<8xf32>
    %121 = vector.multi_reduction <add>, %120, %cst_50 [1] : vector<8x8xf32> to vector<8xf32>
    %122 = vector.shape_cast %121 : vector<8xf32> to vector<8x1xf32>
    %cst_51 = arith.constant 9.99999974E-6 : f32
    %123 = vector.broadcast %cst_51 : f32 to vector<8x1xf32>
    %124 = arith.addf %122, %123 : vector<8x1xf32>
    %125 = math.rsqrt %124 : vector<8x1xf32>
    %126 = arith.mulf %125, %7 : vector<8x1xf32>
    %127 = vector.broadcast %126 : vector<8x1xf32> to vector<8x256xf32>
    %128 = arith.mulf %114, %127 : vector<8x256xf32>
    %129 = vector.broadcast %8 : vector<8x1xf32> to vector<8x256xf32>
    %130 = arith.addf %128, %129 : vector<8x256xf32>
    %cst_52 = arith.constant 2.000000e-01 : f32
    %131 = vector.broadcast %cst_52 : f32 to vector<8x256xf32>
    %132 = arith.mulf %131, %130 : vector<8x256xf32>
    %133 = arith.maximumf %130, %132 : vector<8x256xf32>
    %134 = arith.truncf %133 : vector<8x256xf32> to vector<8x256xbf16>
    %cst_53 = arith.constant dense<0.000000e+00> : vector<4x256xf32>
    %135 = tpu.matmul %12, %134, %cst_53 {dimension_numbers = #tpu.dot_dimension_numbers<[1], [0], [0], [1], [0, 0, 1, 1], [], []>} : vector<4x8xbf16>, vector<8x256xbf16>, vector<4x256xf32> -> vector<4x256xf32>
    %136 = arith.addf %0, %135 : vector<4x256xf32>
    %c0_54 = arith.constant 0 : index
    %c0_55 = arith.constant 0 : index
    %137 = vector.load %arg15[%c0_54, %c0_55] : memref<4x256xf32, #tpu.memory_space<vmem>>, vector<4x256xf32>
    tpu.vector_store %arg15[%c0_54, %c0_55], %136 {strides = array<i32>} : memref<4x256xf32, #tpu.memory_space<vmem>>, vector<4x256xf32>,
    return
  }
  func.func @transform_0(%arg0: i32) -> (i32, i32) {
    %c0_i32 = arith.constant 0 : i32
    %c0_i32_0 = arith.constant 0 : i32
    return %c0_i32, %arg0 : i32, i32
  }
  func.func @transform_1(%arg0: i32) -> (i32, i32) {
    %c0_i32 = arith.constant 0 : i32
    %c0_i32_0 = arith.constant 0 : i32
    %c0_i32_1 = arith.constant 0 : i32
    return %c0_i32, %c0_i32_0 : i32, i32
  }
  func.func @transform_2(%arg0: i32) -> (i32, i32) {
    %c0_i32 = arith.constant 0 : i32
    %c0_i32_0 = arith.constant 0 : i32
    %c0_i32_1 = arith.constant 0 : i32
    return %c0_i32, %c0_i32_0 : i32, i32
  }
  func.func @transform_3(%arg0: i32) -> (i32, i32) {
    %c0_i32 = arith.constant 0 : i32
    %c0_i32_0 = arith.constant 0 : i32
    %c0_i32_1 = arith.constant 0 : i32
    return %c0_i32, %c0_i32_0 : i32, i32
  }
  func.func @transform_4(%arg0: i32) -> (i32, i32) {
    %c0_i32 = arith.constant 0 : i32
    %c0_i32_0 = arith.constant 0 : i32
    %c0_i32_1 = arith.constant 0 : i32
    return %c0_i32, %c0_i32_0 : i32, i32
  }
  func.func @transform_5(%arg0: i32) -> (i32, i32) {
    %c0_i32 = arith.constant 0 : i32
    %c0_i32_0 = arith.constant 0 : i32
    %c0_i32_1 = arith.constant 0 : i32
    return %c0_i32, %c0_i32_0 : i32, i32
  }
  func.func @transform_6(%arg0: i32) -> (i32, i32) {
    %c0_i32 = arith.constant 0 : i32
    %c0_i32_0 = arith.constant 0 : i32
    %c0_i32_1 = arith.constant 0 : i32
    return %c0_i32, %c0_i32_0 : i32, i32
  }
  func.func @transform_7(%arg0: i32) -> (i32, i32) {
    %c0_i32 = arith.constant 0 : i32
    %c0_i32_0 = arith.constant 0 : i32
    %c0_i32_1 = arith.constant 0 : i32
    return %c0_i32, %c0_i32_0 : i32, i32
  }
  func.func @transform_8(%arg0: i32) -> (i32, i32) {
    %c0_i32 = arith.constant 0 : i32
    %c0_i32_0 = arith.constant 0 : i32
    %c0_i32_1 = arith.constant 0 : i32
    return %c0_i32, %c0_i32_0 : i32, i32
  }
  func.func @transform_9(%arg0: i32) -> (i32, i32) {
    %c0_i32 = arith.constant 0 : i32
    %c0_i32_0 = arith.constant 0 : i32
    %c0_i32_1 = arith.constant 0 : i32
    return %c0_i32, %c0_i32_0 : i32, i32
  }
  func.func @transform_10(%arg0: i32) -> (i32, i32) {
    %c0_i32 = arith.constant 0 : i32
    %c0_i32_0 = arith.constant 0 : i32
    %c0_i32_1 = arith.constant 0 : i32
    return %c0_i32, %c0_i32_0 : i32, i32
  }
  func.func @transform_11(%arg0: i32) -> (i32, i32) {
    %c0_i32 = arith.constant 0 : i32
    %c0_i32_0 = arith.constant 0 : i32
    %c0_i32_1 = arith.constant 0 : i32
    return %c0_i32, %c0_i32_0 : i32, i32
  }
  func.func @transform_12(%arg0: i32) -> (i32, i32) {
    %c0_i32 = arith.constant 0 : i32
    %c0_i32_0 = arith.constant 0 : i32
    %c0_i32_1 = arith.constant 0 : i32
    return %c0_i32, %c0_i32_0 : i32, i32
  }
  func.func @transform_13(%arg0: i32) -> (i32, i32) {
    %c0_i32 = arith.constant 0 : i32
    %c0_i32_0 = arith.constant 0 : i32
    %c0_i32_1 = arith.constant 0 : i32
    return %c0_i32, %c0_i32_0 : i32, i32
  }
  func.func @transform_14(%arg0: i32) -> (i32, i32) {
    %c0_i32 = arith.constant 0 : i32
    %c0_i32_0 = arith.constant 0 : i32
    return %c0_i32, %arg0 : i32, i32
  }
}

</mosaic_0001>

<llo_original>
// kernel: tpu_custom_call.1
$region0: #{tpu_custom_call.1}
  #allocation0 [shape = 'u32[]', space=smem, size = 0x4, offset = 0x4, fixed_abs, tag = 'smem constant byte address 0x4 - core index']
  #allocation1 [shape = 'u32[144,128]{1,0:T(1,128)}', space=vmem, size = 0x12000, scoped, tag = 'internal scratch']
  %s0 = inlined_call_operand.hbm [shape: f32[4,512], index: 0, kind: input, shape index: {}, may-alias: {0,14}]
  %s1 = inlined_call_operand.vmem [shape: f32[9,256], index: 1, kind: input, shape index: {}]
  %s2 = inlined_call_operand.vmem [shape: f32[4,1], index: 2, kind: input, shape index: {}]
  %s3 = inlined_call_operand.vmem [shape: f32[4,1], index: 3, kind: input, shape index: {}]
  %s4 = inlined_call_operand.vmem [shape: f32[4,4], index: 4, kind: input, shape index: {}]
  %s5 = inlined_call_operand.vmem [shape: bf16[8,4], index: 5, kind: input, shape index: {}]
  %s6 = inlined_call_operand.vmem [shape: f32[8,1], index: 6, kind: input, shape index: {}]
  %s7 = inlined_call_operand.vmem [shape: f32[8,1], index: 7, kind: input, shape index: {}]
  %s8 = inlined_call_operand.vmem [shape: f32[8,8], index: 8, kind: input, shape index: {}]
  %s9 = inlined_call_operand.vmem [shape: bf16[8,72], index: 9, kind: input, shape index: {}]
  %s10 = inlined_call_operand.vmem [shape: f32[8,1], index: 10, kind: input, shape index: {}]
  %s11 = inlined_call_operand.vmem [shape: f32[8,1], index: 11, kind: input, shape index: {}]
  %s12 = inlined_call_operand.vmem [shape: f32[8,8], index: 12, kind: input, shape index: {}]
  %s13 = inlined_call_operand.vmem [shape: bf16[4,8], index: 13, kind: input, shape index: {}]
  %s14 = inlined_call_operand.hbm [shape: f32[4,512], index: 14, kind: output, shape index: {}, may-alias: {0,14}]
  %s15 = sld [smem:[#allocation0]]
  $region93: #{tpu_custom_call.1} parent=0
    _
  %s17 = ssub.s32 1, %s15
  %s18 = scalar_select 0, %s17, %s15
  $region1: #{tpu_custom_call.1} parent=0
    #allocation2 [shape = 'u8[8192]{0}', space=vmem, size = 0x2000, scoped, tag = 'input window, operand 0']
    #allocation3 [shape = 's32[2]{0}', space=sflag, size = 0x8, scoped, tag = 'scoped memory for tpu_custom_call.1']
    #allocation4 [shape = 's32[2]{0}', space=sflag, size = 0x8, scoped, tag = 'scoped memory for tpu_custom_call.1']
    #allocation5 [shape = 'u8[8192]{0}', space=vmem, size = 0x2000, scoped, tag = 'output window, operand 0']
    %19 = vsyncpa [#allocation3], 0
    %s20 = scalar_lea.sflag [#allocation3], 1
    %21 = vsyncpa %s20, 0
    %22 = vsyncpa [#allocation4], 0
    %s23 = scalar_lea.sflag [#allocation4], 1
    %24 = vsyncpa %s23, 0
    loop: start=0, step=1, limit=4
    $region2: #{tpu_custom_call.1} parent=1 // loop_pre_header
      _
    $region3: #{tpu_custom_call.1} parent=1 // loop_header
      %s26 = sphi 0, %s30
      %p27 = scmp.ge.s32.totalorder %s26, 4
      %s36 = sphi 0, %s38
      %s39 = sphi 0, %s36
      %s40 = sphi 0, %s39
      %s56 = sphi 0, %s40
      %s60 = sphi 0, %s60
      %s62 = sphi 0, %s60
      %s63 = sphi 0, %s62
      %s77 = sphi 0, %s63
      %s81 = sphi 0, %s81
      %s83 = sphi 0, %s81
      %s84 = sphi 0, %s83
      %s98 = sphi 0, %s84
      %s102 = sphi 0, %s102
      %s104 = sphi 0, %s102
      %s105 = sphi 0, %s104
      %s119 = sphi 0, %s105
      %s123 = sphi 0, %s123
      %s125 = sphi 0, %s123
      %s126 = sphi 0, %s125
      %s140 = sphi 0, %s126
      %s144 = sphi 0, %s144
      %s146 = sphi 0, %s144
      %s147 = sphi 0, %s146
      %s161 = sphi 0, %s147
      %s165 = sphi 0, %s165
      %s167 = sphi 0, %s165
      %s168 = sphi 0, %s167
      %s182 = sphi 0, %s168
      %s186 = sphi 0, %s186
      %s188 = sphi 0, %s186
      %s189 = sphi 0, %s188
      %s203 = sphi 0, %s189
      %s207 = sphi 0, %s207
      %s209 = sphi 0, %s207
      %s210 = sphi 0, %s209
      %s224 = sphi 0, %s210
      %s228 = sphi 0, %s228
      %s230 = sphi 0, %s228
      %s231 = sphi 0, %s230
      %s245 = sphi 0, %s231
      %s249 = sphi 0, %s249
      %s251 = sphi 0, %s249
      %s252 = sphi 0, %s251
      %s266 = sphi 0, %s252
      %s270 = sphi 0, %s270
      %s272 = sphi 0, %s270
      %s273 = sphi 0, %s272
      %s287 = sphi 0, %s273
      %s291 = sphi 0, %s291
      %s293 = sphi 0, %s291
      %s294 = sphi 0, %s293
      %s308 = sphi 0, %s294
      %s312 = sphi 0, %s312
      %s314 = sphi 0, %s312
      %s315 = sphi 0, %s314
      %s329 = sphi 0, %s315
      %s335 = sphi 0, %s337
      %s338 = sphi 0, %s335
      %s339 = sphi 0, %s338
      %s355 = sphi 0, %s339
    $region4: #{tpu_custom_call.1} parent=1 // loop_header_branch
      %29 = sbr.rel (%p27) target = $region8
    $region5: #{tpu_custom_call.1} parent=1 // loop_body
      %s31 = ssub.s32 %s26, 1
      %s32 = ssub.s32 %s26, 2
      %s33 = sadd.s32 %s26, 1
      %s34 = ssub.s32 %s26, %s33
      %p35 = scmp.eq.s32.totalorder %s34, 0
      %s37 = sadd.s32 %s36, 1
      %s38 = scalar_select %p35, %s36, %s37
      %p41 = pneg %p35
      %p42 = scmp.eq.s32.totalorder %s26, 1
      %p43 = por %p41, %p42
      %p44 = scmp.ne.s32.totalorder %s36, %s39
      %p45 = scmp.eq.s32.totalorder %s26, 0
      %p46 = por %p44, %p45
      %p47 = scmp.ne.s32.totalorder %s36, %s39
      %p48 = scmp.eq.s32.totalorder %s31, 1
      %p49 = por %p47, %p48
      %p50 = scmp.ne.s32.totalorder %s39, %s40
      %p51 = scmp.eq.s32.totalorder %s31, 0
      %p52 = por %p50, %p51
      %p53 = scmp.ne.s32.totalorder %s39, %s40
      %p54 = scmp.eq.s32.totalorder %s32, 1
      %p55 = por %p53, %p54
      %p57 = scmp.ne.s32.totalorder %s40, %s56
      %p58 = scmp.eq.s32.totalorder %s32, 0
      %p59 = por %p57, %p58
      %s61 = sadd.s32 %s60, 1
      %p64 = scmp.eq.s32.totalorder %s26, 1
      %p65 = scmp.ne.s32.totalorder %s60, %s62
      %p66 = scmp.eq.s32.totalorder %s26, 0
      %p67 = por %p65, %p66
      %p68 = scmp.ne.s32.totalorder %s60, %s62
      %p69 = scmp.eq.s32.totalorder %s31, 1
      %p70 = por %p68, %p69
      %p71 = scmp.ne.s32.totalorder %s62, %s63
      %p72 = scmp.eq.s32.totalorder %s31, 0
      %p73 = por %p71, %p72
      %p74 = scmp.ne.s32.totalorder %s62, %s63
      %p75 = scmp.eq.s32.totalorder %s32, 1
      %p76 = por %p74, %p75
      %p78 = scmp.ne.s32.totalorder %s63, %s77
      %p79 = scmp.eq.s32.totalorder %s32, 0
      %p80 = por %p78, %p79
      %s82 = sadd.s32 %s81, 1
      %p85 = scmp.eq.s32.totalorder %s26, 1
      %p86 = scmp.ne.s32.totalorder %s81, %s83
      %p87 = scmp.eq.s32.totalorder %s26, 0
      %p88 = por %p86, %p87
      %p89 = scmp.ne.s32.totalorder %s81, %s83
      %p90 = scmp.eq.s32.totalorder %s31, 1
      %p91 = por %p89, %p90
      %p92 = scmp.ne.s32.totalorder %s83, %s84
      %p93 = scmp.eq.s32.totalorder %s31, 0
      %p94 = por %p92, %p93
      %p95 = scmp.ne.s32.totalorder %s83, %s84
      %p96 = scmp.eq.s32.totalorder %s32, 1
      %p97 = por %p95, %p96
      %p99 = scmp.ne.s32.totalorder %s84, %s98
      %p100 = scmp.eq.s32.totalorder %s32, 0
      %p101 = por %p99, %p100
      %s103 = sadd.s32 %s102, 1
      %p106 = scmp.eq.s32.totalorder %s26, 1
      %p107 = scmp.ne.s32.totalorder %s102, %s104
      %p108 = scmp.eq.s32.totalorder %s26, 0
      %p109 = por %p107, %p108
      %p110 = scmp.ne.s32.totalorder %s102, %s104
      %p111 = scmp.eq.s32.totalorder %s31, 1
      %p112 = por %p110, %p111
      %p113 = scmp.ne.s32.totalorder %s104, %s105
      %p114 = scmp.eq.s32.totalorder %s31, 0
      %p115 = por %p113, %p114
      %p116 = scmp.ne.s32.totalorder %s104, %s105
      %p117 = scmp.eq.s32.totalorder %s32, 1
      %p118 = por %p116, %p117
      %p120 = scmp.ne.s32.totalorder %s105, %s119
      %p121 = scmp.eq.s32.totalorder %s32, 0
      %p122 = por %p120, %p121
      %s124 = sadd.s32 %s123, 1
      %p127 = scmp.eq.s32.totalorder %s26, 1
      %p128 = scmp.ne.s32.totalorder %s123, %s125
      %p129 = scmp.eq.s32.totalorder %s26, 0
      %p130 = por %p128, %p129
      %p131 = scmp.ne.s32.totalorder %s123, %s125
      %p132 = scmp.eq.s32.totalorder %s31, 1
      %p133 = por %p131, %p132
      %p134 = scmp.ne.s32.totalorder %s125, %s126
      %p135 = scmp.eq.s32.totalorder %s31, 0
      %p136 = por %p134, %p135
      %p137 = scmp.ne.s32.totalorder %s125, %s126
      %p138 = scmp.eq.s32.totalorder %s32, 1
      %p139 = por %p137, %p138
      %p141 = scmp.ne.s32.totalorder %s126, %s140
      %p142 = scmp.eq.s32.totalorder %s32, 0
      %p143 = por %p141, %p142
      %s145 = sadd.s32 %s144, 1
      %p148 = scmp.eq.s32.totalorder %s26, 1
      %p149 = scmp.ne.s32.totalorder %s144, %s146
      %p150 = scmp.eq.s32.totalorder %s26, 0
      %p151 = por %p149, %p150
      %p152 = scmp.ne.s32.totalorder %s144, %s146
      %p153 = scmp.eq.s32.totalorder %s31, 1
      %p154 = por %p152, %p153
      %p155 = scmp.ne.s32.totalorder %s146, %s147
      %p156 = scmp.eq.s32.totalorder %s31, 0
      %p157 = por %p155, %p156
      %p158 = scmp.ne.s32.totalorder %s146, %s147
      %p159 = scmp.eq.s32.totalorder %s32, 1
      %p160 = por %p158, %p159
      %p162 = scmp.ne.s32.totalorder %s147, %s161
      %p163 = scmp.eq.s32.totalorder %s32, 0
      %p164 = por %p162, %p163
      %s166 = sadd.s32 %s165, 1
      %p169 = scmp.eq.s32.totalorder %s26, 1
      %p170 = scmp.ne.s32.totalorder %s165, %s167
      %p171 = scmp.eq.s32.totalorder %s26, 0
      %p172 = por %p170, %p171
      %p173 = scmp.ne.s32.totalorder %s165, %s167
      %p174 = scmp.eq.s32.totalorder %s31, 1
      %p175 = por %p173, %p174
      %p176 = scmp.ne.s32.totalorder %s167, %s168
      %p177 = scmp.eq.s32.totalorder %s31, 0
      %p178 = por %p176, %p177
      %p179 = scmp.ne.s32.totalorder %s167, %s168
      %p180 = scmp.eq.s32.totalorder %s32, 1
      %p181 = por %p179, %p180
      %p183 = scmp.ne.s32.totalorder %s168, %s182
      %p184 = scmp.eq.s32.totalorder %s32, 0
      %p185 = por %p183, %p184
      %s187 = sadd.s32 %s186, 1
      %p190 = scmp.eq.s32.totalorder %s26, 1
      %p191 = scmp.ne.s32.totalorder %s186, %s188
      %p192 = scmp.eq.s32.totalorder %s26, 0
      %p193 = por %p191, %p192
      %p194 = scmp.ne.s32.totalorder %s186, %s188
      %p195 = scmp.eq.s32.totalorder %s31, 1
      %p196 = por %p194, %p195
      %p197 = scmp.ne.s32.totalorder %s188, %s189
      %p198 = scmp.eq.s32.totalorder %s31, 0
      %p199 = por %p197, %p198
      %p200 = scmp.ne.s32.totalorder %s188, %s189
      %p201 = scmp.eq.s32.totalorder %s32, 1
      %p202 = por %p200, %p201
      %p204 = scmp.ne.s32.totalorder %s189, %s203
      %p205 = scmp.eq.s32.totalorder %s32, 0
      %p206 = por %p204, %p205
      %s208 = sadd.s32 %s207, 1
      %p211 = scmp.eq.s32.totalorder %s26, 1
      %p212 = scmp.ne.s32.totalorder %s207, %s209
      %p213 = scmp.eq.s32.totalorder %s26, 0
      %p214 = por %p212, %p213
      %p215 = scmp.ne.s32.totalorder %s207, %s209
      %p216 = scmp.eq.s32.totalorder %s31, 1
      %p217 = por %p215, %p216
      %p218 = scmp.ne.s32.totalorder %s209, %s210
      %p219 = scmp.eq.s32.totalorder %s31, 0
      %p220 = por %p218, %p219
      %p221 = scmp.ne.s32.totalorder %s209, %s210
      %p222 = scmp.eq.s32.totalorder %s32, 1
      %p223 = por %p221, %p222
      %p225 = scmp.ne.s32.totalorder %s210, %s224
      %p226 = scmp.eq.s32.totalorder %s32, 0
      %p227 = por %p225, %p226
      %s229 = sadd.s32 %s228, 1
      %p232 = scmp.eq.s32.totalorder %s26, 1
      %p233 = scmp.ne.s32.totalorder %s228, %s230
      %p234 = scmp.eq.s32.totalorder %s26, 0
      %p235 = por %p233, %p234
      %p236 = scmp.ne.s32.totalorder %s228, %s230
      %p237 = scmp.eq.s32.totalorder %s31, 1
      %p238 = por %p236, %p237
      %p239 = scmp.ne.s32.totalorder %s230, %s231
      %p240 = scmp.eq.s32.totalorder %s31, 0
      %p241 = por %p239, %p240
      %p242 = scmp.ne.s32.totalorder %s230, %s231
      %p243 = scmp.eq.s32.totalorder %s32, 1
      %p244 = por %p242, %p243
      %p246 = scmp.ne.s32.totalorder %s231, %s245
      %p247 = scmp.eq.s32.totalorder %s32, 0
      %p248 = por %p246, %p247
      %s250 = sadd.s32 %s249, 1
      %p253 = scmp.eq.s32.totalorder %s26, 1
      %p254 = scmp.ne.s32.totalorder %s249, %s251
      %p255 = scmp.eq.s32.totalorder %s26, 0
      %p256 = por %p254, %p255
      %p257 = scmp.ne.s32.totalorder %s249, %s251
      %p258 = scmp.eq.s32.totalorder %s31, 1
      %p259 = por %p257, %p258
      %p260 = scmp.ne.s32.totalorder %s251, %s252
      %p261 = scmp.eq.s32.totalorder %s31, 0
      %p262 = por %p260, %p261
      %p263 = scmp.ne.s32.totalorder %s251, %s252
      %p264 = scmp.eq.s32.totalorder %s32, 1
      %p265 = por %p263, %p264
      %p267 = scmp.ne.s32.totalorder %s252, %s266
      %p268 = scmp.eq.s32.totalorder %s32, 0
      %p269 = por %p267, %p268
      %s271 = sadd.s32 %s270, 1
      %p274 = scmp.eq.s32.totalorder %s26, 1
      %p275 = scmp.ne.s32.totalorder %s270, %s272
      %p276 = scmp.eq.s32.totalorder %s26, 0
      %p277 = por %p275, %p276
      %p278 = scmp.ne.s32.totalorder %s270, %s272
      %p279 = scmp.eq.s32.totalorder %s31, 1
      %p280 = por %p278, %p279
      %p281 = scmp.ne.s32.totalorder %s272, %s273
      %p282 = scmp.eq.s32.totalorder %s31, 0
      %p283 = por %p281, %p282
      %p284 = scmp.ne.s32.totalorder %s272, %s273
      %p285 = scmp.eq.s32.totalorder %s32, 1
      %p286 = por %p284, %p285
      %p288 = scmp.ne.s32.totalorder %s273, %s287
      %p289 = scmp.eq.s32.totalorder %s32, 0
      %p290 = por %p288, %p289
      %s292 = sadd.s32 %s291, 1
      %p295 = scmp.eq.s32.totalorder %s26, 1
      %p296 = scmp.ne.s32.totalorder %s291, %s293
      %p297 = scmp.eq.s32.totalorder %s26, 0
      %p298 = por %p296, %p297
      %p299 = scmp.ne.s32.totalorder %s291, %s293
      %p300 = scmp.eq.s32.totalorder %s31, 1
      %p301 = por %p299, %p300
      %p302 = scmp.ne.s32.totalorder %s293, %s294
      %p303 = scmp.eq.s32.totalorder %s31, 0
      %p304 = por %p302, %p303
      %p305 = scmp.ne.s32.totalorder %s293, %s294
      %p306 = scmp.eq.s32.totalorder %s32, 1
      %p307 = por %p305, %p306
      %p309 = scmp.ne.s32.totalorder %s294, %s308
      %p310 = scmp.eq.s32.totalorder %s32, 0
      %p311 = por %p309, %p310
      %s313 = sadd.s32 %s312, 1
      %p316 = scmp.eq.s32.totalorder %s26, 1
      %p317 = scmp.ne.s32.totalorder %s312, %s314
      %p318 = scmp.eq.s32.totalorder %s26, 0
      %p319 = por %p317, %p318
      %p320 = scmp.ne.s32.totalorder %s312, %s314
      %p321 = scmp.eq.s32.totalorder %s31, 1
      %p322 = por %p320, %p321
      %p323 = scmp.ne.s32.totalorder %s314, %s315
      %p324 = scmp.eq.s32.totalorder %s31, 0
      %p325 = por %p323, %p324
      %p326 = scmp.ne.s32.totalorder %s314, %s315
      %p327 = scmp.eq.s32.totalorder %s32, 1
      %p328 = por %p326, %p327
      %p330 = scmp.ne.s32.totalorder %s315, %s329
      %p331 = scmp.eq.s32.totalorder %s32, 0
      %p332 = por %p330, %p331
      %s333 = ssub.s32 %s26, %s33
      %p334 = scmp.eq.s32.totalorder %s333, 0
      %s336 = sadd.s32 %s335, 1
      %s337 = scalar_select %p334, %s335, %s336
      %p340 = pneg %p334
      %p341 = scmp.eq.s32.totalorder %s26, 1
      %p342 = por %p340, %p341
      %p343 = scmp.ne.s32.totalorder %s335, %s338
      %p344 = scmp.eq.s32.totalorder %s26, 0
      %p345 = por %p343, %p344
      %p346 = scmp.ne.s32.totalorder %s335, %s338
      %p347 = scmp.eq.s32.totalorder %s31, 1
      %p348 = por %p346, %p347
      %p349 = scmp.ne.s32.totalorder %s338, %s339
      %p350 = scmp.eq.s32.totalorder %s31, 0
      %p351 = por %p349, %p350
      %p352 = scmp.ne.s32.totalorder %s338, %s339
      %p353 = scmp.eq.s32.totalorder %s32, 1
      %p354 = por %p352, %p353
      %p356 = scmp.ne.s32.totalorder %s339, %s355
      %p357 = scmp.eq.s32.totalorder %s32, 0
      %p358 = por %p356, %p357
      %p359 = scmp.le.s32.totalorder 1, %s26
      %p360 = scmp.lt.s32.totalorder %s26, 3
      %p361 = pnand %p359, %p360
      %p362 = pneg %p361
      // Predicated region
      $region9: #{tpu_custom_call.1} parent=5 // pred_check
        _
      $region10: #{tpu_custom_call.1} parent=5 // pred_check_branch
        %364 = sbr.rel (%p361) target = $region12
      $region11: #{tpu_custom_call.1} parent=5 // pred_region
        %s365 = ssub.s32 %s26, 1
        // Predicated region
        $region13: #{tpu_custom_call.1} parent=11 // pred_check
          %p366 = pneg %p73
        $region14: #{tpu_custom_call.1} parent=11 // pred_check_branch
          %368 = sbr.rel (%p366) target = $region16
        $region15: #{tpu_custom_call.1} parent=11 // pred_region
          _
        $region16: #{tpu_custom_call.1} parent=11 // pred_fallthru
          _
        // Predicated region
        $region17: #{tpu_custom_call.1} parent=11 // pred_check
          %p369 = pneg %p94
        $region18: #{tpu_custom_call.1} parent=11 // pred_check_branch
          %371 = sbr.rel (%p369) target = $region20
        $region19: #{tpu_custom_call.1} parent=11 // pred_region
          _
        $region20: #{tpu_custom_call.1} parent=11 // pred_fallthru
          _
        // Predicated region
        $region21: #{tpu_custom_call.1} parent=11 // pred_check
          %p372 = pneg %p115
        $region22: #{tpu_custom_call.1} parent=11 // pred_check_branch
          %374 = sbr.rel (%p372) target = $region24
        $region23: #{tpu_custom_call.1} parent=11 // pred_region
          _
        $region24: #{tpu_custom_call.1} parent=11 // pred_fallthru
          _
        // Predicated region
        $region25: #{tpu_custom_call.1} parent=11 // pred_check
          %p375 = pneg %p136
        $region26: #{tpu_custom_call.1} parent=11 // pred_check_branch
          %377 = sbr.rel (%p375) target = $region28
        $region27: #{tpu_custom_call.1} parent=11 // pred_region
          _
        $region28: #{tpu_custom_call.1} parent=11 // pred_fallthru
          _
        // Predicated region
        $region29: #{tpu_custom_call.1} parent=11 // pred_check
          %p378 = pneg %p157
        $region30: #{tpu_custom_call.1} parent=11 // pred_check_branch
          %380 = sbr.rel (%p378) target = $region32
        $region31: #{tpu_custom_call.1} parent=11 // pred_region
          _
        $region32: #{tpu_custom_call.1} parent=11 // pred_fallthru
          _
        // Predicated region
        $region33: #{tpu_custom_call.1} parent=11 // pred_check
          %p381 = pneg %p178
        $region34: #{tpu_custom_call.1} parent=11 // pred_check_branch
          %383 = sbr.rel (%p381) target = $region36
        $region35: #{tpu_custom_call.1} parent=11 // pred_region
          _
        $region36: #{tpu_custom_call.1} parent=11 // pred_fallthru
          _
        // Predicated region
        $region37: #{tpu_custom_call.1} parent=11 // pred_check
          %p384 = pneg %p199
        $region38: #{tpu_custom_call.1} parent=11 // pred_check_branch
          %386 = sbr.rel (%p384) target = $region40
        $region39: #{tpu_custom_call.1} parent=11 // pred_region
          _
        $region40: #{tpu_custom_call.1} parent=11 // pred_fallthru
          _
        // Predicated region
        $region41: #{tpu_custom_call.1} parent=11 // pred_check
          %p387 = pneg %p220
        $region42: #{tpu_custom_call.1} parent=11 // pred_check_branch
          %389 = sbr.rel (%p387) target = $region44
        $region43: #{tpu_custom_call.1} parent=11 // pred_region
          _
        $region44: #{tpu_custom_call.1} parent=11 // pred_fallthru
          _
        // Predicated region
        $region45: #{tpu_custom_call.1} parent=11 // pred_check
          %p390 = pneg %p241
        $region46: #{tpu_custom_call.1} parent=11 // pred_check_branch
          %392 = sbr.rel (%p390) target = $region48
        $region47: #{tpu_custom_call.1} parent=11 // pred_region
          _
        $region48: #{tpu_custom_call.1} parent=11 // pred_fallthru
          _
        // Predicated region
        $region49: #{tpu_custom_call.1} parent=11 // pred_check
          %p393 = pneg %p262
        $region50: #{tpu_custom_call.1} parent=11 // pred_check_branch
          %395 = sbr.rel (%p393) target = $region52
        $region51: #{tpu_custom_call.1} parent=11 // pred_region
          _
        $region52: #{tpu_custom_call.1} parent=11 // pred_fallthru
          _
        // Predicated region
        $region53: #{tpu_custom_call.1} parent=11 // pred_check
          %p396 = pneg %p283
        $region54: #{tpu_custom_call.1} parent=11 // pred_check_branch
          %398 = sbr.rel (%p396) target = $region56
        $region55: #{tpu_custom_call.1} parent=11 // pred_region
          _
        $region56: #{tpu_custom_call.1} parent=11 // pred_fallthru
          _
        // Predicated region
        $region57: #{tpu_custom_call.1} parent=11 // pred_check
          %p399 = pneg %p304
        $region58: #{tpu_custom_call.1} parent=11 // pred_check_branch
          %401 = sbr.rel (%p399) target = $region60
        $region59: #{tpu_custom_call.1} parent=11 // pred_region
          _
        $region60: #{tpu_custom_call.1} parent=11 // pred_fallthru
          _
        // Predicated region
        $region61: #{tpu_custom_call.1} parent=11 // pred_check
          %p402 = pneg %p325
        $region62: #{tpu_custom_call.1} parent=11 // pred_check_branch
          %404 = sbr.rel (%p402) target = $region64
        $region63: #{tpu_custom_call.1} parent=11 // pred_region
          _
        $region64: #{tpu_custom_call.1} parent=11 // pred_fallthru
          _
      $region12: #{tpu_custom_call.1} parent=5 // pred_fallthru
        _
      %p405 = scmp.lt.s32.totalorder %s26, 2
      // Predicated region
      $region65: #{tpu_custom_call.1} parent=5 // pred_check
        %p406 = pneg %p405
      $region66: #{tpu_custom_call.1} parent=5 // pred_check_branch
        %408 = sbr.rel (%p406) target = $region68
      $region67: #{tpu_custom_call.1} parent=5 // pred_region
        // Predicated region
        $region69: #{tpu_custom_call.1} parent=67 // pred_check
          %p409 = pneg %p46
        $region70: #{tpu_custom_call.1} parent=67 // pred_check_branch
          %411 = sbr.rel (%p409) target = $region72
        $region71: #{tpu_custom_call.1} parent=67 // pred_region
          %s412 = sand.u32 %s36, 1
          %s413 = scalar_lea.sflag [#allocation3], %s412
          %s414 = sand.u32 %s36, 1
          %s415 = smul.addr %s414, 8
          %s416 = scalar_lea.vmem [#allocation2], %s415
          %s417 = smul.u32 2, %s26
          %s419 = ssub.s32 128, 128
          %420 = vsyncadd %s413, %s419
          %s421 = smul.addr %s417, 64
          %s422 = scalar_lea.hbm %s0, %s421
          %s424 = sshll.u32 %s416, 4
          %s425 = int_to_ptr.vmem [resolvable:$true] %s424
          %427 = dma.hbm_to_vmem [thread:$0]  %s422, 128, %s425, %s413
        $region72: #{tpu_custom_call.1} parent=67 // pred_fallthru
          _
      $region68: #{tpu_custom_call.1} parent=5 // pred_fallthru
        _
      %p428 = scmp.le.s32.totalorder 1, %s26
      %p429 = scmp.lt.s32.totalorder %s26, 3
      %p430 = pnand %p428, %p429
      %p431 = pneg %p430
      // Predicated region
      $region73: #{tpu_custom_call.1} parent=5 // pred_check
        _
      $region74: #{tpu_custom_call.1} parent=5 // pred_check_branch
        %433 = sbr.rel (%p430) target = $region76
      $region75: #{tpu_custom_call.1} parent=5 // pred_region
        %s434 = ssub.s32 %s26, 1
        %s435 = sand.u32 %s39, 1
        %s436 = scalar_lea.sflag [#allocation3], %s435
        %s437 = sand.u32 %s39, 1
        %s438 = smul.addr %s437, 8
        %s439 = scalar_lea.vmem [#allocation2], %s438
        // Predicated region
        $region77: #{tpu_custom_call.1} parent=75 // pred_check
          %p440 = pneg %p52
        $region78: #{tpu_custom_call.1} parent=75 // pred_check_branch
          %442 = sbr.rel (%p440) target = $region80
        $region79: #{tpu_custom_call.1} parent=75 // pred_region
          %443 = dma.done %s436, 128
        $region80: #{tpu_custom_call.1} parent=75 // pred_fallthru
          _
        %s444 = sand.u32 %s39, 1
        %s445 = scalar_lea.sflag [#allocation3], %s444
        %s446 = sand.u32 %s39, 1
        %s447 = smul.addr %s446, 8
        %s448 = scalar_lea.vmem [#allocation2], %s447
        %p449 = pneg %p52
        %p450 = pneg %p49
        %p451 = pneg %p73
        %p452 = pneg %p70
        %p453 = pneg %p94
        %p454 = pneg %p91
        %p455 = pneg %p115
        %p456 = pneg %p112
        %p457 = pneg %p136
        %p458 = pneg %p133
        %p459 = pneg %p157
        %p460 = pneg %p154
        %p461 = pneg %p178
        %p462 = pneg %p175
        %p463 = pneg %p199
        %p464 = pneg %p196
        %p465 = pneg %p220
        %p466 = pneg %p217
        %p467 = pneg %p241
        %p468 = pneg %p238
        %p469 = pneg %p262
        %p470 = pneg %p259
        %p471 = pneg %p283
        %p472 = pneg %p280
        %p473 = pneg %p304
        %p474 = pneg %p301
        %p475 = pneg %p325
        %p476 = pneg %p322
        %p477 = pneg %p351
        %p478 = pneg %p348
        %s479 = sand.u32 %s338, 1
        %s480 = scalar_lea.sflag [#allocation4], %s479
        %s481 = sand.u32 %s338, 1
        %s482 = smul.addr %s481, 8
        %s483 = scalar_lea.vmem [#allocation5], %s482
        %s484 = smul.u32 2, %s31
        %s485 = smul.u32 2, %s31
        %v487 = vld [vmem:[%s439] sm:$0xff]
        %v488 = vld [vmem:[%s2] sm:$0xf]
        %v489 = vld [vmem:[%s3] sm:$0xf]
        %v490 = vld [vmem:[%s4] sm:$0xf]
        %v491 = vld [vmem:[%s6] sm:$0xff]
        %v492 = vld [vmem:[%s7] sm:$0xff]
        %v493 = vld [vmem:[%s8] sm:$0xff]
        %v494 = vld [vmem:[%s10] sm:$0xff]
        %v495 = vld [vmem:[%s11] sm:$0xff]
        %v496 = vld [vmem:[%s12] sm:$0xff]
        %v497 = vld [vmem:[%s5] sm:$0xf]
        %v498 = vld [vmem:[%s9] sm:$0xf]
        %v499 = vld [vmem:[%s13] sm:$0x3]
        %v501 = vcombine.high %v487, %v487
        %vm503 = vcmask 1043456
        %v504 = vsel %vm503, %v487, 0.0
        %v505 = vsel %vm503, %v501, 0.0
        %v506 = vadd.f32 %v504, %v505
        %507 = vadd.xlane.f32.xlu0 %v506
        %v508 = vpop.xlane.xlu0 %507
        %v510 = vlaneseq
        %v511 = vand.u32 %v510, 127
        %v512 = vlaneseq
        %v513 = vshrl.u32 %v512, 7
        %v514 = vsub.s32 %v511, %v513
        %v515 = vrot.slane %v508, %v514
        %vm516 = vcmask 1042434
        %v517 = vsel %vm516, %v515, %v515
        %vm518 = vcmask 1043459
        %v519 = vsel %vm518, %v515, %v517
        %v521 = vmul.f32 %v490, %v519
        %vm522 = vcmask 27648
        %v523 = vsel %vm522, %v521, 0.0
        %524 = vadd.xlane.f32.xlu0 %v523
        %v525 = vpop.xlane.xlu0 %524
        %v528 = vunpack.c.l.s4 839922192
        %v529 = vunpack.c.0.s8 %v528
        %v530 = vlaneseq
        %v531 = vshrl.u32 %v530, 7
        %v532 = vsub.s32 %v529, %v531
        %v533 = vrot.slane %v525, %v532
        %v535 = vsub.f32 %v487, %v533
        %v536 = vmul.f32 %v535, %v535
        %v538 = vcombine.high %v536, %v536
        %v540 = vsel %vm503, %v536, 0.0
        %v541 = vsel %vm503, %v538, 0.0
        %v542 = vadd.f32 %v540, %v541
        %543 = vadd.xlane.f32.xlu0 %v542
        %v544 = vpop.xlane.xlu0 %543
        %v546 = vlaneseq
        %v547 = vshrl.u32 %v546, 7
        %v548 = vsub.s32 %v511, %v547
        %v549 = vrot.slane %v544, %v548
        %v550 = vsel %vm516, %v549, %v549
        %v551 = vsel %vm518, %v549, %v550
        %v553 = vmul.f32 %v490, %v551
        %v554 = vsel %vm522, %v553, 0.0
        %555 = vadd.xlane.f32.xlu0 %v554
        %v556 = vpop.xlane.xlu0 %555
        %v557 = vadd.f32 %v556, 1e-05
        %v558 = vrsqrt.pop %v557
        %v559 = vmul.f32 %v558, %v488
        %561 = vset.pattern.permute.xlu0 0
        %562 = vperm.xlu0 %561, %v559
        %v563 = vpop.permute.xlu0 %562
        %v565 = vunpack.c.l.s4 839922192
        %v566 = vunpack.c.0.s8 %v565
        %v567 = vlaneseq
        %v568 = vshrl.u32 %v567, 7
        %v569 = vsub.s32 %v566, %v568
        %v570 = vrot.slane %v563, %v569
        %v572 = vmul.f32 %v535, %v570
        %574 = vset.pattern.permute.xlu0 0
        %575 = vperm.xlu0 %574, %v489
        %v576 = vpop.permute.xlu0 %575
        %v578 = vunpack.c.l.s4 839922192
        %v579 = vunpack.c.0.s8 %v578
        %v580 = vlaneseq
        %v581 = vshrl.u32 %v580, 7
        %v582 = vsub.s32 %v579, %v581
        %v583 = vrot.slane %v576, %v582
        %v585 = vadd.f32 %v572, %v583
        %v586 = vmul.f32 %v585, 0.2
        %v587 = vmax.f32 %v585, %v586
        %v589 = vcombine.high %v587, %v587
        %v591 = vpack.c.bf16 %v587, %v587
        %v592 = vpack.c.bf16 %v589, %v589
        %vm593 = vcmask 31744
        %v595 = vsel %vm593, %v497, 0
        %vm597 = vcmask 1041408
        %v599 = vsel %vm597, %v591, 0
        %v602 = vsel %vm597, %v592, 0
        %604 = vmatprep.subr.bf16.mxu0 %v602
        %605 = vmatpush1.bf16.msra.mxu0 %v599
        %606 = vmatprep.subr.bf16.mxu0 0
        %607 = vmatpush1.bf16.msra.mxu0 0
        %608 = vmatprep.subr.bf16.mxu0 0
        %609 = vmatpush1.bf16.msra.mxu0 0
        %610 = vmatprep.subr.bf16.mxu0 0
        %611 = vmatpush1.bf16.msra.mxu0 0
        %612 = vmatprep.subr.bf16.mxu0 0
        %613 = vmatpush1.bf16.msra.mxu0 0
        %614 = vmatprep.subr.bf16.mxu0 0
        %615 = vmatpush1.bf16.msra.mxu0 0
        %616 = vmatprep.subr.bf16.mxu0 0
        %617 = vmatpush1.bf16.msra.mxu0 0
        %618 = vmatprep.subr.bf16.mxu0 0
        %619 = vmatpush1.bf16.msra.mxu0 0
        %620 = vmatprep.subr.bf16.mxu0 0
        %621 = vmatpush1.bf16.msra.mxu0 0
        %622 = vmatprep.subr.bf16.mxu0 0
        %623 = vmatpush1.bf16.msra.mxu0 0
        %624 = vmatprep.subr.bf16.mxu0 0
        %625 = vmatpush1.bf16.msra.mxu0 0
        %626 = vmatprep.subr.bf16.mxu0 0
        %627 = vmatpush1.bf16.msra.mxu0 0
        %628 = vmatprep.subr.bf16.mxu0 0
        %629 = vmatpush1.bf16.msra.mxu0 0
        %630 = vmatprep.subr.bf16.mxu0 0
        %631 = vmatpush1.bf16.msra.mxu0 0
        %632 = vmatprep.subr.bf16.mxu0 0
        %633 = vmatpush1.bf16.msra.mxu0 0
        %634 = vmatprep.subr.bf16.mxu0 0
        %635 = vmatpush1.bf16.msra.mxu0 0
        %636 = vmatprep.mubr.bf16.mxu0 0
        %637 = vmatmul.mubr.bf16.gmra.mrb[0].mxu0 %v595
        %v638 = vpop.f32.mrb[0].mxu0
        %v639 = vadd.f32 0.0, %v638
        %v640 = vpop.f32.mrb[0].mxu0
        %v641 = vadd.f32 0.0, %v640
        %v642 = vpop.f32.mrb[0].mxu0
        %v643 = vpop.f32.mrb[0].mxu0
        %644 = vdwg.mxu0
        %v645 = vadd.f32 %v639, %v641
        %646 = vadd.xlane.f32.xlu0 %v645
        %v647 = vpop.xlane.xlu0 %646
        %v649 = vlaneseq
        %v650 = vshrl.u32 %v649, 7
        %v651 = vsub.s32 %v511, %v650
        %v652 = vrot.slane %v647, %v651
        %v653 = vsel %vm516, %v652, %v652
        %v654 = vsel %vm518, %v652, %v653
        %vm655 = vcmask 1044484
        %v656 = vsel %vm655, %v652, %v654
        %vm657 = vcmask 1045509
        %v658 = vsel %vm657, %v652, %v656
        %vm659 = vcmask 1046534
        %v660 = vsel %vm659, %v652, %v658
        %vm661 = vcmask 1047559
        %v662 = vsel %vm661, %v652, %v660
        %v664 = vmul.f32 %v493, %v662
        %vm665 = vcmask 64512
        %v666 = vsel %vm665, %v664, 0.0
        %667 = vadd.xlane.f32.xlu0 %v666
        %v668 = vpop.xlane.xlu0 %667
        %v669 = vsub.f32 %v639, %v668
        %v670 = vsub.f32 %v641, %v668
        %v671 = vmul.f32 %v669, %v669
        %v672 = vmul.f32 %v670, %v670
        %v673 = vadd.f32 %v671, %v672
        %674 = vadd.xlane.f32.xlu0 %v673
        %v675 = vpop.xlane.xlu0 %674
        %v677 = vlaneseq
        %v678 = vshrl.u32 %v677, 7
        %v679 = vsub.s32 %v511, %v678
        %v680 = vrot.slane %v675, %v679
        %v681 = vsel %vm516, %v680, %v680
        %v682 = vsel %vm518, %v680, %v681
        %v683 = vsel %vm655, %v680, %v682
        %v684 = vsel %vm657, %v680, %v683
        %v685 = vsel %vm659, %v680, %v684
        %v686 = vsel %vm661, %v680, %v685
        %v688 = vmul.f32 %v493, %v686
        %v689 = vsel %vm665, %v688, 0.0
        %690 = vadd.xlane.f32.xlu0 %v689
        %v691 = vpop.xlane.xlu0 %690
        %v692 = vadd.f32 %v691, 1e-05
        %v693 = vrsqrt.pop %v692
        %v694 = vmul.f32 %v693, %v491
        %696 = vset.pattern.permute.xlu0 0
        %697 = vperm.xlu0 %696, %v694
        %v698 = vpop.permute.xlu0 %697
        %v700 = vmul.f32 %v669, %v698
        %v701 = vmul.f32 %v670, %v698
        %703 = vset.pattern.permute.xlu0 0
        %704 = vperm.xlu0 %703, %v492
        %v705 = vpop.permute.xlu0 %704
        %v707 = vadd.f32 %v700, %v705
        %v708 = vadd.f32 %v701, %v705
        %v709 = vmul.f32 %v707, 0.2
        %v710 = vmul.f32 %v708, 0.2
        %v711 = vmax.f32 %v707, %v709
        %v712 = vmax.f32 %v708, %v710
        %713 = vrot.lane.b32.xlu0 %v711, 17
        %v714 = vpop.permute.xlu0 %713
        %715 = vrot.lane.b32.xlu0 %v712, 17
        %v716 = vpop.permute.xlu0 %715
        %vm717 = vcmp.lt.s32.totalorder %v511, 17
        %v718 = vsel %vm717, %v714, %v716
        %v719 = vsel %vm717, %v716, %v714
        %v720 = vld [vmem:[%s1] ss:$8 sm:$0x3]
        %v722 = vlaneseq
        %v723 = vshrl.u32 %v722, 7
        %v724 = vsub.s32 0, %v723
        %v725 = vrot.slane %v720, %v724
        %v726 = vlaneseq
        %v727 = vshrl.u32 %v726, 7
        %v728 = vsub.s32 1, %v727
        %v729 = vrot.slane %v720, %v728
        %v732 = vmul.f32 %v719, %v725
        %v733 = vmul.f32 %v718, %v729
        %734 = vrot.lane.b32.xlu0 %v711, 16
        %v735 = vpop.permute.xlu0 %734
        %736 = vrot.lane.b32.xlu0 %v712, 16
        %v737 = vpop.permute.xlu0 %736
        %vm738 = vcmp.lt.s32.totalorder %v511, 16
        %v739 = vsel %vm738, %v735, %v737
        %v740 = vsel %vm738, %v737, %v735
        %s741 = scalar_lea.vmem %s1, 1
        %v742 = vld [vmem:[%s741] ss:$8 sm:$0x3]
        %v744 = vlaneseq
        %v745 = vshrl.u32 %v744, 7
        %v746 = vsub.s32 0, %v745
        %v747 = vrot.slane %v742, %v746
        %v748 = vlaneseq
        %v749 = vshrl.u32 %v748, 7
        %v750 = vsub.s32 1, %v749
        %v751 = vrot.slane %v742, %v750
        %v754 = vmul.f32 %v740, %v747
        %v755 = vmul.f32 %v739, %v751
        %756 = vrot.lane.b32.xlu0 %v711, 15
        %v757 = vpop.permute.xlu0 %756
        %758 = vrot.lane.b32.xlu0 %v712, 15
        %v759 = vpop.permute.xlu0 %758
        %vm760 = vcmp.lt.s32.totalorder %v511, 15
        %v761 = vsel %vm760, %v757, %v759
        %v762 = vsel %vm760, %v759, %v757
        %s763 = scalar_lea.vmem %s1, 2
        %v764 = vld [vmem:[%s763] ss:$8 sm:$0x3]
        %v766 = vlaneseq
        %v767 = vshrl.u32 %v766, 7
        %v768 = vsub.s32 0, %v767
        %v769 = vrot.slane %v764, %v768
        %v770 = vlaneseq
        %v771 = vshrl.u32 %v770, 7
        %v772 = vsub.s32 1, %v771
        %v773 = vrot.slane %v764, %v772
        %v776 = vmul.f32 %v762, %v769
        %v777 = vmul.f32 %v761, %v773
        %778 = vrot.lane.b32.xlu0 %v711, 1
        %v779 = vpop.permute.xlu0 %778
        %780 = vrot.lane.b32.xlu0 %v712, 1
        %v781 = vpop.permute.xlu0 %780
        %vm782 = vcmp.lt.s32.totalorder %v511, 1
        %v783 = vsel %vm782, %v779, %v781
        %v784 = vsel %vm782, %v781, %v779
        %s785 = scalar_lea.vmem %s1, 3
        %v786 = vld [vmem:[%s785] ss:$8 sm:$0x3]
        %v788 = vlaneseq
        %v789 = vshrl.u32 %v788, 7
        %v790 = vsub.s32 0, %v789
        %v791 = vrot.slane %v786, %v790
        %v792 = vlaneseq
        %v793 = vshrl.u32 %v792, 7
        %v794 = vsub.s32 1, %v793
        %v795 = vrot.slane %v786, %v794
        %v798 = vmul.f32 %v784, %v791
        %v799 = vmul.f32 %v783, %v795
        %800 = vrot.lane.b32.xlu0 %v711, 127
        %v801 = vpop.permute.xlu0 %800
        %802 = vrot.lane.b32.xlu0 %v712, 127
        %v803 = vpop.permute.xlu0 %802
        %vm804 = vcmp.lt.s32.totalorder %v511, 127
        %v805 = vsel %vm804, %v801, %v803
        %v806 = vsel %vm804, %v803, %v801
        %s807 = scalar_lea.vmem %s1, 5
        %v808 = vld [vmem:[%s807] ss:$8 sm:$0x3]
        %v810 = vlaneseq
        %v811 = vshrl.u32 %v810, 7
        %v812 = vsub.s32 0, %v811
        %v813 = vrot.slane %v808, %v812
        %v814 = vlaneseq
        %v815 = vshrl.u32 %v814, 7
        %v816 = vsub.s32 1, %v815
        %v817 = vrot.slane %v808, %v816
        %v820 = vmul.f32 %v805, %v813
        %v821 = vmul.f32 %v806, %v817
        %822 = vrot.lane.b32.xlu0 %v711, 113
        %v823 = vpop.permute.xlu0 %822
        %824 = vrot.lane.b32.xlu0 %v712, 113
        %v825 = vpop.permute.xlu0 %824
        %vm826 = vcmp.lt.s32.totalorder %v511, 113
        %v827 = vsel %vm826, %v823, %v825
        %v828 = vsel %vm826, %v825, %v823
        %s829 = scalar_lea.vmem %s1, 6
        %v830 = vld [vmem:[%s829] ss:$8 sm:$0x3]
        %v832 = vlaneseq
        %v833 = vshrl.u32 %v832, 7
        %v834 = vsub.s32 0, %v833
        %v835 = vrot.slane %v830, %v834
        %v836 = vlaneseq
        %v837 = vshrl.u32 %v836, 7
        %v838 = vsub.s32 1, %v837
        %v839 = vrot.slane %v830, %v838
        %v842 = vmul.f32 %v827, %v835
        %v843 = vmul.f32 %v828, %v839
        %844 = vrot.lane.b32.xlu0 %v711, 112
        %v845 = vpop.permute.xlu0 %844
        %846 = vrot.lane.b32.xlu0 %v712, 112
        %v847 = vpop.permute.xlu0 %846
        %vm848 = vcmp.lt.s32.totalorder %v511, 112
        %v849 = vsel %vm848, %v845, %v847
        %v850 = vsel %vm848, %v847, %v845
        %s851 = scalar_lea.vmem %s1, 7
        %v852 = vld [vmem:[%s851] ss:$8 sm:$0x3]
        %v854 = vlaneseq
        %v855 = vshrl.u32 %v854, 7
        %v856 = vsub.s32 0, %v855
        %v857 = vrot.slane %v852, %v856
        %v858 = vlaneseq
        %v859 = vshrl.u32 %v858, 7
        %v860 = vsub.s32 1, %v859
        %v861 = vrot.slane %v852, %v860
        %v864 = vmul.f32 %v849, %v857
        %v865 = vmul.f32 %v850, %v861
        %866 = vrot.lane.b32.xlu0 %v711, 111
        %v867 = vpop.permute.xlu0 %866
        %868 = vrot.lane.b32.xlu0 %v712, 111
        %v869 = vpop.permute.xlu0 %868
        %vm870 = vcmp.lt.s32.totalorder %v511, 111
        %v871 = vsel %vm870, %v867, %v869
        %v872 = vsel %vm870, %v869, %v867
        %s873 = scalar_lea.vmem %s1, 16
        %v874 = vld [vmem:[%s873] ss:$8 sm:$0x3]
        %v876 = vlaneseq
        %v877 = vshrl.u32 %v876, 7
        %v878 = vsub.s32 0, %v877
        %v879 = vrot.slane %v874, %v878
        %v880 = vlaneseq
        %v881 = vshrl.u32 %v880, 7
        %v882 = vsub.s32 1, %v881
        %v883 = vrot.slane %v874, %v882
        %v886 = vmul.f32 %v871, %v879
        %v887 = vmul.f32 %v872, %v883
        %v888 = vpack.c.bf16 %v754, %v732
        %v889 = vpack.c.bf16 %v755, %v733
        %v890 = vpack.c.bf16 %v798, %v776
        %v891 = vpack.c.bf16 %v799, %v777
        %v892 = vpack.c.bf16 %v820, %v711
        %v893 = vpack.c.bf16 %v821, %v712
        %v894 = vpack.c.bf16 %v864, %v842
        %v895 = vpack.c.bf16 %v865, %v843
        %v896 = vpack.c.bf16 %v886, %v886
        %v897 = vpack.c.bf16 %v887, %v887
        %vm898 = vcmask 588800
        %v900 = vsel %vm898, %v498, 0
        %v903 = vsel %vm503, %v896, 0
        %v906 = vsel %vm503, %v897, 0
        %908 = vmatprep.subr.bf16.mxu0 %v889
        %909 = vmatpush1.bf16.msra.mxu0 %v888
        %910 = vmatprep.subr.bf16.mxu0 %v891
        %911 = vmatpush1.bf16.msra.mxu0 %v890
        %912 = vmatprep.subr.bf16.mxu0 %v893
        %913 = vmatpush1.bf16.msra.mxu0 %v892
        %914 = vmatprep.subr.bf16.mxu0 %v895
        %915 = vmatpush1.bf16.msra.mxu0 %v894
        %916 = vmatprep.subr.bf16.mxu0 %v906
        %917 = vmatpush1.bf16.msra.mxu0 %v903
        %918 = vmatprep.subr.bf16.mxu0 0
        %919 = vmatpush1.bf16.msra.mxu0 0
        %920 = vmatprep.subr.bf16.mxu0 0
        %921 = vmatpush1.bf16.msra.mxu0 0
        %922 = vmatprep.subr.bf16.mxu0 0
        %923 = vmatpush1.bf16.msra.mxu0 0
        %924 = vmatprep.subr.bf16.mxu0 0
        %925 = vmatpush1.bf16.msra.mxu0 0
        %926 = vmatprep.subr.bf16.mxu0 0
        %927 = vmatpush1.bf16.msra.mxu0 0
        %928 = vmatprep.subr.bf16.mxu0 0
        %929 = vmatpush1.bf16.msra.mxu0 0
        %930 = vmatprep.subr.bf16.mxu0 0
        %931 = vmatpush1.bf16.msra.mxu0 0
        %932 = vmatprep.subr.bf16.mxu0 0
        %933 = vmatpush1.bf16.msra.mxu0 0
        %934 = vmatprep.subr.bf16.mxu0 0
        %935 = vmatpush1.bf16.msra.mxu0 0
        %936 = vmatprep.subr.bf16.mxu0 0
        %937 = vmatpush1.bf16.msra.mxu0 0
        %938 = vmatprep.subr.bf16.mxu0 0
        %939 = vmatpush1.bf16.msra.mxu0 0
        %940 = vmatprep.mubr.bf16.mxu0 0
        %941 = vmatmul.mubr.bf16.gmra.mrb[0].mxu0 %v900
        %v942 = vpop.f32.mrb[0].mxu0
        %v943 = vadd.f32 0.0, %v942
        %v944 = vpop.f32.mrb[0].mxu0
        %v945 = vadd.f32 0.0, %v944
        %v946 = vpop.f32.mrb[0].mxu0
        %v947 = vpop.f32.mrb[0].mxu0
        %948 = vdwg.mxu0
        %v949 = vadd.f32 %v943, %v945
        %950 = vadd.xlane.f32.xlu0 %v949
        %v951 = vpop.xlane.xlu0 %950
        %v953 = vlaneseq
        %v954 = vshrl.u32 %v953, 7
        %v955 = vsub.s32 %v511, %v954
        %v956 = vrot.slane %v951, %v955
        %v957 = vsel %vm516, %v956, %v956
        %v958 = vsel %vm518, %v956, %v957
        %v959 = vsel %vm655, %v956, %v958
        %v960 = vsel %vm657, %v956, %v959
        %v961 = vsel %vm659, %v956, %v960
        %v962 = vsel %vm661, %v956, %v961
        %v964 = vmul.f32 %v496, %v962
        %v965 = vsel %vm665, %v964, 0.0
        %966 = vadd.xlane.f32.xlu0 %v965
        %v967 = vpop.xlane.xlu0 %966
        %v968 = vsub.f32 %v943, %v967
        %v969 = vsub.f32 %v945, %v967
        %v970 = vmul.f32 %v968, %v968
        %v971 = vmul.f32 %v969, %v969
        %v972 = vadd.f32 %v970, %v971
        %973 = vadd.xlane.f32.xlu0 %v972
        %v974 = vpop.xlane.xlu0 %973
        %v976 = vlaneseq
        %v977 = vshrl.u32 %v976, 7
        %v978 = vsub.s32 %v511, %v977
        %v979 = vrot.slane %v974, %v978
        %v980 = vsel %vm516, %v979, %v979
        %v981 = vsel %vm518, %v979, %v980
        %v982 = vsel %vm655, %v979, %v981
        %v983 = vsel %vm657, %v979, %v982
        %v984 = vsel %vm659, %v979, %v983
        %v985 = vsel %vm661, %v979, %v984
        %v987 = vmul.f32 %v496, %v985
        %v988 = vsel %vm665, %v987, 0.0
        %989 = vadd.xlane.f32.xlu0 %v988
        %v990 = vpop.xlane.xlu0 %989
        %v991 = vadd.f32 %v990, 1e-05
        %v992 = vrsqrt.pop %v991
        %v993 = vmul.f32 %v992, %v494
        %995 = vset.pattern.permute.xlu0 0
        %996 = vperm.xlu0 %995, %v993
        %v997 = vpop.permute.xlu0 %996
        %v999 = vmul.f32 %v968, %v997
        %v1000 = vmul.f32 %v969, %v997
        %1002 = vset.pattern.permute.xlu0 0
        %1003 = vperm.xlu0 %1002, %v495
        %v1004 = vpop.permute.xlu0 %1003
        %v1006 = vadd.f32 %v999, %v1004
        %v1007 = vadd.f32 %v1000, %v1004
        %v1008 = vmul.f32 %v1006, 0.2
        %v1009 = vmul.f32 %v1007, 0.2
        %v1010 = vmax.f32 %v1006, %v1008
        %v1011 = vmax.f32 %v1007, %v1009
        %v1012 = vpack.c.bf16 %v1010, %v1010
        %v1013 = vpack.c.bf16 %v1011, %v1011
        %v1015 = vsel %vm665, %v499, 0
        %v1018 = vsel %vm503, %v1012, 0
        %v1021 = vsel %vm503, %v1013, 0
        %1023 = vmatprep.subr.bf16.mxu0 %v1021
        %1024 = vmatpush1.bf16.msra.mxu0 %v1018
        %1025 = vmatprep.subr.bf16.mxu0 0
        %1026 = vmatpush1.bf16.msra.mxu0 0
        %1027 = vmatprep.subr.bf16.mxu0 0
        %1028 = vmatpush1.bf16.msra.mxu0 0
        %1029 = vmatprep.subr.bf16.mxu0 0
        %1030 = vmatpush1.bf16.msra.mxu0 0
        %1031 = vmatprep.subr.bf16.mxu0 0
        %1032 = vmatpush1.bf16.msra.mxu0 0
        %1033 = vmatprep.subr.bf16.mxu0 0
        %1034 = vmatpush1.bf16.msra.mxu0 0
        %1035 = vmatprep.subr.bf16.mxu0 0
        %1036 = vmatpush1.bf16.msra.mxu0 0
        %1037 = vmatprep.subr.bf16.mxu0 0
        %1038 = vmatpush1.bf16.msra.mxu0 0
        %1039 = vmatprep.subr.bf16.mxu0 0
        %1040 = vmatpush1.bf16.msra.mxu0 0
        %1041 = vmatprep.subr.bf16.mxu0 0
        %1042 = vmatpush1.bf16.msra.mxu0 0
        %1043 = vmatprep.subr.bf16.mxu0 0
        %1044 = vmatpush1.bf16.msra.mxu0 0
        %1045 = vmatprep.subr.bf16.mxu0 0
        %1046 = vmatpush1.bf16.msra.mxu0 0
        %1047 = vmatprep.subr.bf16.mxu0 0
        %1048 = vmatpush1.bf16.msra.mxu0 0
        %1049 = vmatprep.subr.bf16.mxu0 0
        %1050 = vmatpush1.bf16.msra.mxu0 0
        %1051 = vmatprep.subr.bf16.mxu0 0
        %1052 = vmatpush1.bf16.msra.mxu0 0
        %1053 = vmatprep.subr.bf16.mxu0 0
        %1054 = vmatpush1.bf16.msra.mxu0 0
        %1055 = vmatprep.mubr.bf16.mxu0 0
        %1056 = vmatmul.mubr.bf16.gmra.mrb[0].mxu0 %v1015
        %v1057 = vpop.f32.mrb[0].mxu0
        %v1058 = vadd.f32 0.0, %v1057
        %v1059 = vpop.f32.mrb[0].mxu0
        %v1060 = vadd.f32 0.0, %v1059
        %v1061 = vpop.f32.mrb[0].mxu0
        %v1062 = vpop.f32.mrb[0].mxu0
        %1063 = vdwg.mxu0
        %v1066 = vcombine.low %v1058, %v1060
        %v1068 = vadd.f32 %v487, %v1066
        %1069 = vst [vmem:[%s483] sm:$0xff] %v1068
        %s1070 = sand.u32 %s338, 1
        %s1071 = scalar_lea.sflag [#allocation4], %s1070
        %s1072 = sand.u32 %s338, 1
        %s1073 = smul.addr %s1072, 8
        %s1074 = scalar_lea.vmem [#allocation5], %s1073
        // Predicated region
        $region81: #{tpu_custom_call.1} parent=75 // pred_check
          %p1075 = pneg %p348
        $region82: #{tpu_custom_call.1} parent=75 // pred_check_branch
          %1077 = sbr.rel (%p1075) target = $region84
        $region83: #{tpu_custom_call.1} parent=75 // pred_region
          %s1078 = smul.u32 2, %s31
          %s1080 = ssub.s32 128, 128
          %1081 = vsyncadd %s1071, %s1080
          %s1082 = smul.addr %s1078, 64
          %s1083 = scalar_lea.hbm %s14, %s1082
          %s1085 = sshll.u32 %s1074, 4
          %s1086 = int_to_ptr.vmem [resolvable:$true] %s1085
          %1088 = dma.vmem_to_hbm [thread:$0]  %s1086, 128, %s1083, %s1071
        $region84: #{tpu_custom_call.1} parent=75 // pred_fallthru
          _
      $region76: #{tpu_custom_call.1} parent=5 // pred_fallthru
        _
      %p1089 = scmp.le.s32.totalorder 2, %s26
      // Predicated region
      $region85: #{tpu_custom_call.1} parent=5 // pred_check
        %p1090 = pneg %p1089
      $region86: #{tpu_custom_call.1} parent=5 // pred_check_branch
        %1092 = sbr.rel (%p1090) target = $region88
      $region87: #{tpu_custom_call.1} parent=5 // pred_region
        %s1093 = ssub.s32 %s26, 2
        // Predicated region
        $region89: #{tpu_custom_call.1} parent=87 // pred_check
          %p1094 = pneg %p354
        $region90: #{tpu_custom_call.1} parent=87 // pred_check_branch
          %1096 = sbr.rel (%p1094) target = $region92
        $region91: #{tpu_custom_call.1} parent=87 // pred_region
          %s1097 = sand.u32 %s339, 1
          %s1098 = scalar_lea.sflag [#allocation4], %s1097
          %s1099 = sand.u32 %s339, 1
          %s1100 = smul.addr %s1099, 8
          %s1101 = scalar_lea.vmem [#allocation5], %s1100
          %1102 = dma.done %s1098, 128
        $region92: #{tpu_custom_call.1} parent=87 // pred_fallthru
          _
      $region88: #{tpu_custom_call.1} parent=5 // pred_fallthru
        _
    $region6: #{tpu_custom_call.1} parent=1 // loop_footer
      %s30 = sadd.s32 1, %s26
    $region7: #{tpu_custom_call.1} parent=1 // loop_footer_branch
      %25 = sbr.rel target = $region3
    $region8: #{tpu_custom_call.1} parent=1 // loop_exit
      _
    %1103 = vsyncpa [#allocation3], 1
    %s1104 = scalar_lea.sflag [#allocation3], 1
    %1105 = vsyncpa %s1104, 1
    %1106 = vsyncpa [#allocation4], 1
    %s1107 = scalar_lea.sflag [#allocation4], 1
    %1108 = vsyncpa %s1107, 1

</llo_original>
